<compile_context>
chip_gen: v5e
topology: v5e:2x2
jax: 0.10.0
libtpu: 0.0.40
codegen_flags: <defaults>
</compile_context>

<pallas_src>
import functools

import jax
import jax.numpy as jnp
from jax import lax
from jax.experimental import pallas as pl
from jax.experimental.pallas import tpu as pltpu


# ------------------------------- fused kernel ------------------------------- #

def _cross_attn_kernel(x_ref, cond_ref, wq_ref, wk_ref, wv_ref, wo_ref, b_ref,
                       o_ref, k_scr, v_scr, attn_scr, *,
                       n_heads, d_head, sk, skp, cache_kv):
    """One grid step = (batch b, q-tile i); all heads handled in-kernel.

    x_ref    : (1, tq, d_model)    bf16 query rows for this (b, i)
    cond_ref : (1, skp, d_cond)    bf16 conditional sequence for this b (key-padded)
    wq_ref   : (d_model, d_attn)   bf16 (softmax scale pre-folded)
    wk_ref   : (d_cond,  d_attn)   bf16
    wv_ref   : (d_cond,  d_attn)   bf16
    wo_ref   : (d_attn,  d_model)  bf16
    b_ref    : (1, d_model)        f32 output bias
    o_ref    : (1, tq, d_model)    output rows for this (b, i)
    k_scr    : (skp, d_attn)       bf16 projected keys   (cached per batch element)
    v_scr    : (skp, d_attn)       bf16 projected values (cached per batch element)
    attn_scr : (tq, d_attn)        f32 staging slab for per-head attention outputs
    """
    i = pl.program_id(1)

    def project_kv():
        c = cond_ref[0]                                           # (skp, d_cond)
        k_scr[...] = jnp.dot(c, wk_ref[...],
                             preferred_element_type=jnp.float32).astype(k_scr.dtype)
        v_scr[...] = jnp.dot(c, wv_ref[...],
                             preferred_element_type=jnp.float32).astype(v_scr.dtype)

    if cache_kv:
        # cond only changes with b and the grid is (B, nq) row-major, so i == 0
        # marks a new batch element: project K/V once and reuse for all q tiles.
        pl.when(i == 0)(project_kv)
    else:
        project_kv()

    x = x_ref[0]                                                  # (tq, d_model)
    q = jnp.dot(x, wq_ref[...], preferred_element_type=jnp.float32)
    q = q.astype(jnp.bfloat16)                                    # (tq, d_attn)
    k = k_scr[...]                                                # (skp, d_attn)
    v = v_scr[...]

    if skp != sk:   # mask out padded key columns (static decision)
        key_mask = lax.broadcasted_iota(jnp.int32, (1, skp), 1) < sk

    # Per-head attention.  NOTE: the PyTorch `is_inplace` two-half softmax is
    # mathematically identical to a plain softmax over the last axis.
    for h in range(n_heads):
        sl = slice(h * d_head, (h + 1) * d_head)
        s = lax.dot_general(q[:, sl], k[:, sl], (((1,), (1,)), ((), ())),
                            preferred_element_type=jnp.float32)   # (tq, skp) f32
        if skp != sk:
            s = jnp.where(key_mask, s, -1e30)
        m = jnp.max(s, axis=-1, keepdims=True)
        p = jnp.exp(s - m)
        denom = jnp.sum(p, axis=-1, keepdims=True)
        o_h = jnp.dot(p.astype(jnp.bfloat16), v[:, sl],
                      preferred_element_type=jnp.float32)         # (tq, d_head)
        # divide after the PV matmul (touches tq*Dh, not tq*Sk); EUP reciprocal
        attn_scr[:, sl] = o_h * pl.reciprocal(denom, approx=True)

    # Single d_attn-deep output projection + bias for the whole q tile.
    out = jnp.dot(attn_scr[...].astype(jnp.bfloat16), wo_ref[...],
                  preferred_element_type=jnp.float32)             # (tq, d_model)
    out = out + b_ref[...]
    o_ref[0] = out.astype(o_ref.dtype)


# ------------------------------- host wrapper -------------------------------- #

def cross_attention_forward(x, cond, params, n_heads, d_head, *, q_tile=None):
    """Reproduces CrossAttention.forward (normal_attention path)."""
    if cond is None:            # self-attention fallback (requires d_cond == d_model)
        cond = x
    B, Sq, d_model = x.shape
    _, Sk, d_cond = cond.shape
    d_attn = n_heads * d_head
    scale = float(d_head) ** (-0.5)

    # One-time host-side weight prep: bf16 MXU operands, scale folded into Wq.
    wq = (params["wq_t"] * scale).astype(jnp.bfloat16)            # (d_model, d_attn)
    wk = params["wk_t"].astype(jnp.bfloat16)                      # (d_cond,  d_attn)
    wv = params["wv_t"].astype(jnp.bfloat16)                      # (d_cond,  d_attn)
    wo = params["wo_t"].astype(jnp.bfloat16)                      # (d_attn,  d_model)
    bias = params["bo"].reshape(1, d_model).astype(jnp.float32)

    # Pad the key axis to a lane-dense multiple of 128 (padded keys masked in-kernel).
    skp = ((Sk + 127) // 128) * 128
    cond_b = cond.astype(jnp.bfloat16)
    if skp != Sk:
        cond_b = jnp.pad(cond_b, ((0, 0), (0, skp - Sk), (0, 0)))
    x_b = x.astype(jnp.bfloat16)

    # Query tiling.
    if q_tile is None:
        q_tile = min(Sq, 256)
        if B == 1 and Sq > 8:
            # Split Sq so both v7x TensorCores get at least one parallel program.
            half = -(-Sq // 2)
            q_tile = min(q_tile, max(8, ((half + 7) // 8) * 8))
    nq = pl.cdiv(Sq, q_tile)

    parallel_q = (B == 1 and nq > 1)          # shard q tiles across cores instead
    cache_kv = (nq > 1) and not parallel_q    # K/V reuse needs sequential q-tile axis
    dims = ("parallel", "parallel") if parallel_q else ("parallel", "arbitrary")

    kernel = functools.partial(_cross_attn_kernel, n_heads=n_heads, d_head=d_head,
                               sk=Sk, skp=skp, cache_kv=cache_kv)

    return pl.pallas_call(
        kernel,
        out_shape=jax.ShapeDtypeStruct((B, Sq, d_model), x.dtype),
        grid_spec=pltpu.PrefetchScalarGridSpec(
            num_scalar_prefetch=0,
            grid=(B, nq),
            in_specs=[
                pl.BlockSpec((1, q_tile, d_model), lambda b, i: (b, i, 0)),
                pl.BlockSpec((1, skp, d_cond),     lambda b, i: (b, 0, 0)),
                # weights/bias: constant index_map -> fetched once, resident in VMEM
                pl.BlockSpec((d_model, d_attn),    lambda b, i: (0, 0)),
                pl.BlockSpec((d_cond, d_attn),     lambda b, i: (0, 0)),
                pl.BlockSpec((d_cond, d_attn),     lambda b, i: (0, 0)),
                pl.BlockSpec((d_attn, d_model),    lambda b, i: (0, 0)),
                pl.BlockSpec((1, d_model),         lambda b, i: (0, 0)),
            ],
            out_specs=pl.BlockSpec((1, q_tile, d_model), lambda b, i: (b, i, 0)),
            scratch_shapes=[
                pltpu.VMEM((skp, d_attn), jnp.bfloat16),   # K cache
                pltpu.VMEM((skp, d_attn), jnp.bfloat16),   # V cache
                pltpu.VMEM((q_tile, d_attn), jnp.float32), # per-head attn outputs
            ],
        ),
        compiler_params=pltpu.CompilerParams(
            dimension_semantics=dims,
            vmem_limit_bytes=64 * 1024 * 1024),
    )(x_b, cond_b, wq, wk, wv, wo, bias)


# ------------------------------ reference (jnp) ------------------------------ #

def cross_attention_reference(x, cond, params, n_heads, d_head):
    if cond is None:
        cond = x
    B, Sq, _ = x.shape
    Sk = cond.shape[1]
    scale = float(d_head) ** (-0.5)
    hp = lax.Precision.HIGHEST
    q = jnp.einsum("bsd,df->bsf", x, params["wq_t"], precision=hp)
    k = jnp.einsum("bsd,df->bsf", cond, params["wk_t"], precision=hp)
    v = jnp.einsum("bsd,df->bsf", cond, params["wv_t"], precision=hp)
    q = q.reshape(B, Sq, n_heads, d_head)
    k = k.reshape(B, Sk, n_heads, d_head)
    v = v.reshape(B, Sk, n_heads, d_head)
    attn = jnp.einsum("bihd,bjhd->bhij", q, k, precision=hp) * scale
    attn = jax.nn.softmax(attn, axis=-1)
    out = jnp.einsum("bhij,bjhd->bihd", attn, v, precision=hp)
    out = out.reshape(B, Sq, n_heads * d_head)
    return jnp.einsum("bif,fd->bid", out, params["wo_t"], precision=hp) + params["bo"]


# ----------------------------------- main ------------------------------------ #

def _make_params(key, d_model, d_cond, n_heads, d_head):
    d_attn = n_heads * d_head
    kq, kk, kv, ko, kb = jax.random.split(key, 5)
    # PyTorch Linear stores (out, in); we keep weights pre-transposed as (in, out).
    return {
        "wq_t": jax.random.normal(kq, (d_model, d_attn), jnp.float32) * 0.1,
        "wk_t": jax.random.normal(kk, (d_cond, d_attn), jnp.float32) * 0.1,
        "wv_t": jax.random.normal(kv, (d_cond, d_attn), jnp.float32) * 0.1,
        "wo_t": jax.random.normal(ko, (d_attn, d_model), jnp.float32) * 0.1,
        "bo":   jax.random.normal(kb, (d_model,), jnp.float32) * 0.01,
    }


def _check(y, y_ref, name, atol=5e-2, rtol=5e-2):
    err = float(jnp.max(jnp.abs(y - y_ref)))
    assert jnp.allclose(y, y_ref, atol=atol, rtol=rtol), f"{name}: max abs err {err}"


if __name__ == "__main__":
    B, HW, d_model = 2, 16, 32          # x: (batch, height*width, d_model)
    n_cond, d_cond = 8, 16              # cond: (batch, n_cond, d_cond)
    n_heads, d_head = 4, 8

    key = jax.random.PRNGKey(0)
    kx, kc, kp1, kp2, kx3, kc3 = jax.random.split(key, 6)

    x = jax.random.normal(kx, (B, HW, d_model), dtype=jnp.float32)
    cond = jax.random.normal(kc, (B, n_cond, d_cond), dtype=jnp.float32)

    # --- cross-attention path (cond given, d_cond != d_model) ---
    params_cross = _make_params(kp1, d_model, d_cond, n_heads, d_head)
    y_cross = jax.block_until_ready(
        cross_attention_forward(x, cond, params_cross, n_heads, d_head))
    y_cross_ref = cross_attention_reference(x, cond, params_cross, n_heads, d_head)
    assert y_cross.shape == (B, HW, d_model)
    _check(y_cross, y_cross_ref, "cross")

    # --- self-attention fallback (cond is None). As in the PyTorch module, this
    # path uses to_k/to_v on x itself, so it requires d_cond == d_model. ---
    params_self = _make_params(kp2, d_model, d_model, n_heads, d_head)
    y_self = jax.block_until_ready(
        cross_attention_forward(x, None, params_self, n_heads, d_head))
    y_self_ref = cross_attention_reference(x, None, params_self, n_heads, d_head)
    assert y_self.shape == (B, HW, d_model)
    _check(y_self, y_self_ref, "self")

    # --- tail-tile / batch==1 path: Sq not a multiple of q_tile, ragged Sk ---
    x3 = jax.random.normal(kx3, (1, 20, d_model), dtype=jnp.float32)
    cond3 = jax.random.normal(kc3, (1, 5, d_cond), dtype=jnp.float32)
    y3 = jax.block_until_ready(
        cross_attention_forward(x3, cond3, params_cross, n_heads, d_head, q_tile=8))
    y3_ref = cross_attention_reference(x3, cond3, params_cross, n_heads, d_head)
    assert y3.shape == (1, 20, d_model)
    _check(y3, y3_ref, "tail-tile")

    print("KERNEL_OK")
</pallas_src>

<mosaic_0001>
module attributes {stable_mosaic.version = 11 : i64} {
  func.func @_cross_attn_kernel(%arg0: i32, %arg1: i32, %arg2: memref<1x16x32xbf16, #tpu.memory_space<vmem>>, %arg3: memref<1x128x16xbf16, #tpu.memory_space<vmem>>, %arg4: memref<32x32xbf16, #tpu.memory_space<vmem>>, %arg5: memref<16x32xbf16, #tpu.memory_space<vmem>>, %arg6: memref<16x32xbf16, #tpu.memory_space<vmem>>, %arg7: memref<32x32xbf16, #tpu.memory_space<vmem>>, %arg8: memref<1x32xf32, #tpu.memory_space<vmem>>, %arg9: memref<1x16x32xf32, #tpu.memory_space<vmem>>, %arg10: memref<128x32xbf16, #tpu.memory_space<vmem>>, %arg11: memref<128x32xbf16, #tpu.memory_space<vmem>>, %arg12: memref<16x32xf32, #tpu.memory_space<vmem>>) attributes {dimension_semantics = [#tpu.dimension_semantics<parallel>, #tpu.dimension_semantics<arbitrary>], iteration_bounds = array<i64: 2, 1>, scalar_prefetch = 0 : i64, scratch_operands = 3 : i64, tpu.core_type = #tpu.core_type<tc>, window_params = [{transform_indices = @transform_0, window_bounds = array<i64: 1, 16, 32>}, {transform_indices = @transform_1, window_bounds = array<i64: 1, 128, 16>}, {pipeline_mode = #tpu.pipeline_mode<synchronous>, transform_indices = @transform_2, window_bounds = array<i64: 32, 32>}, {pipeline_mode = #tpu.pipeline_mode<synchronous>, transform_indices = @transform_3, window_bounds = array<i64: 16, 32>}, {pipeline_mode = #tpu.pipeline_mode<synchronous>, transform_indices = @transform_4, window_bounds = array<i64: 16, 32>}, {pipeline_mode = #tpu.pipeline_mode<synchronous>, transform_indices = @transform_5, window_bounds = array<i64: 32, 32>}, {pipeline_mode = #tpu.pipeline_mode<synchronous>, transform_indices = @transform_6, window_bounds = array<i64: 1, 32>}, {transform_indices = @transform_7, window_bounds = array<i64: 1, 16, 32>}]} {
    %c0 = arith.constant 0 : index
    %c0_0 = arith.constant 0 : index
    %c0_1 = arith.constant 0 : index
    %0 = vector.load %arg3[%c0, %c0_0, %c0_1] : memref<1x128x16xbf16, #tpu.memory_space<vmem>>, vector<1x128x16xbf16>
    %1 = vector.shape_cast %0 : vector<1x128x16xbf16> to vector<128x16xbf16>
    %c0_2 = arith.constant 0 : index
    %c0_3 = arith.constant 0 : index
    %2 = vector.load %arg5[%c0_2, %c0_3] : memref<16x32xbf16, #tpu.memory_space<vmem>>, vector<16x32xbf16>
    %cst = arith.constant dense<0.000000e+00> : vector<128x32xf32>
    %3 = tpu.matmul %1, %2, %cst {dimension_numbers = #tpu.dot_dimension_numbers<[1], [0], [0], [1], [0, 0, 1, 1], [], []>} : vector<128x16xbf16>, vector<16x32xbf16>, vector<128x32xf32> -> vector<128x32xf32>
    %4 = arith.truncf %3 : vector<128x32xf32> to vector<128x32xbf16>
    %c0_4 = arith.constant 0 : index
    %c0_5 = arith.constant 0 : index
    %5 = vector.load %arg10[%c0_4, %c0_5] : memref<128x32xbf16, #tpu.memory_space<vmem>>, vector<128x32xbf16>
    tpu.vector_store %arg10[%c0_4, %c0_5], %4 {strides = array<i32>} : memref<128x32xbf16, #tpu.memory_space<vmem>>, vector<128x32xbf16>,
    %c0_6 = arith.constant 0 : index
    %c0_7 = arith.constant 0 : index
    %6 = vector.load %arg6[%c0_6, %c0_7] : memref<16x32xbf16, #tpu.memory_space<vmem>>, vector<16x32xbf16>
    %cst_8 = arith.constant dense<0.000000e+00> : vector<128x32xf32>
    %7 = tpu.matmul %1, %6, %cst_8 {dimension_numbers = #tpu.dot_dimension_numbers<[1], [0], [0], [1], [0, 0, 1, 1], [], []>} : vector<128x16xbf16>, vector<16x32xbf16>, vector<128x32xf32> -> vector<128x32xf32>
    %8 = arith.truncf %7 : vector<128x32xf32> to vector<128x32xbf16>
    %c0_9 = arith.constant 0 : index
    %c0_10 = arith.constant 0 : index
    %9 = vector.load %arg11[%c0_9, %c0_10] : memref<128x32xbf16, #tpu.memory_space<vmem>>, vector<128x32xbf16>
    tpu.vector_store %arg11[%c0_9, %c0_10], %8 {strides = array<i32>} : memref<128x32xbf16, #tpu.memory_space<vmem>>, vector<128x32xbf16>,
    %c0_11 = arith.constant 0 : index
    %c0_12 = arith.constant 0 : index
    %c0_13 = arith.constant 0 : index
    %10 = vector.load %arg2[%c0_11, %c0_12, %c0_13] : memref<1x16x32xbf16, #tpu.memory_space<vmem>>, vector<1x16x32xbf16>
    %11 = vector.shape_cast %10 : vector<1x16x32xbf16> to vector<16x32xbf16>
    %c0_14 = arith.constant 0 : index
    %c0_15 = arith.constant 0 : index
    %12 = vector.load %arg4[%c0_14, %c0_15] : memref<32x32xbf16, #tpu.memory_space<vmem>>, vector<32x32xbf16>
    %cst_16 = arith.constant dense<0.000000e+00> : vector<16x32xf32>
    %13 = tpu.matmul %11, %12, %cst_16 {dimension_numbers = #tpu.dot_dimension_numbers<[1], [0], [0], [1], [0, 0, 1, 1], [], []>} : vector<16x32xbf16>, vector<32x32xbf16>, vector<16x32xf32> -> vector<16x32xf32>
    %14 = arith.truncf %13 : vector<16x32xf32> to vector<16x32xbf16>
    %c0_17 = arith.constant 0 : index
    %c0_18 = arith.constant 0 : index
    %15 = vector.load %arg10[%c0_17, %c0_18] : memref<128x32xbf16, #tpu.memory_space<vmem>>, vector<128x32xbf16>
    %c0_19 = arith.constant 0 : index
    %c0_20 = arith.constant 0 : index
    %16 = vector.load %arg11[%c0_19, %c0_20] : memref<128x32xbf16, #tpu.memory_space<vmem>>, vector<128x32xbf16>
    %17 = tpu.iota {dimensions = array<i32: 1>} : vector<1x128xi32>
    %c8_i32 = arith.constant 8 : i32
    %18 = vector.broadcast %c8_i32 : i32 to vector<1x128xi32>
    %19 = arith.cmpi slt, %17, %18 : vector<1x128xi32>
    %20 = vector.extract_strided_slice %14 {offsets = [0, 0], sizes = [16, 8], strides = [1, 1]} : vector<16x32xbf16> to vector<16x8xbf16>
    %21 = vector.extract_strided_slice %15 {offsets = [0, 0], sizes = [128, 8], strides = [1, 1]} : vector<128x32xbf16> to vector<128x8xbf16>
    %cst_21 = arith.constant dense<0.000000e+00> : vector<16x128xf32>
    %22 = tpu.matmul %20, %21, %cst_21 {dimension_numbers = #tpu.dot_dimension_numbers<[1], [1], [0], [0], [0, 0, 1, 0], [], []>} : vector<16x8xbf16>, vector<128x8xbf16>, vector<16x128xf32> -> vector<16x128xf32>
    %cst_22 = arith.constant -1.000000e+30 : f32
    %23 = vector.shape_cast %19 : vector<1x128xi1> to vector<1x128xi1>
    %24 = vector.broadcast %23 : vector<1x128xi1> to vector<16x128xi1>
    %25 = vector.broadcast %cst_22 : f32 to vector<16x128xf32>
    %26 = arith.select %24, %22, %25 : vector<16x128xi1>, vector<16x128xf32>
    %cst_23 = arith.constant dense<0xFF800000> : vector<16xf32>
    %27 = vector.multi_reduction <maximumf>, %26, %cst_23 [1] : vector<16x128xf32> to vector<16xf32>
    %28 = vector.shape_cast %27 : vector<16xf32> to vector<16x1xf32>
    %29 = vector.broadcast %28 : vector<16x1xf32> to vector<16x128xf32>
    %30 = arith.subf %26, %29 : vector<16x128xf32>
    %31 = math.exp %30 : vector<16x128xf32>
    %cst_24 = arith.constant dense<0.000000e+00> : vector<16xf32>
    %32 = vector.multi_reduction <add>, %31, %cst_24 [1] : vector<16x128xf32> to vector<16xf32>
    %33 = vector.shape_cast %32 : vector<16xf32> to vector<16x1xf32>
    %34 = arith.truncf %31 : vector<16x128xf32> to vector<16x128xbf16>
    %35 = vector.extract_strided_slice %16 {offsets = [0, 0], sizes = [128, 8], strides = [1, 1]} : vector<128x32xbf16> to vector<128x8xbf16>
    %cst_25 = arith.constant dense<0.000000e+00> : vector<16x8xf32>
    %36 = tpu.matmul %34, %35, %cst_25 {dimension_numbers = #tpu.dot_dimension_numbers<[1], [0], [0], [1], [0, 0, 1, 1], [], []>} : vector<16x128xbf16>, vector<128x8xbf16>, vector<16x8xf32> -> vector<16x8xf32>
    %37 = tpu.reciprocal %33 {approx = true} : vector<16x1xf32> -> vector<16x1xf32>
    %38 = vector.broadcast %37 : vector<16x1xf32> to vector<16x8xf32>
    %39 = arith.mulf %36, %38 : vector<16x8xf32>
    %c0_26 = arith.constant 0 : index
    %c0_27 = arith.constant 0 : index
    %40 = vector.load %arg12[%c0_26, %c0_27] : memref<16x32xf32, #tpu.memory_space<vmem>>, vector<16x8xf32>
    tpu.vector_store %arg12[%c0_26, %c0_27], %39 {strides = array<i32>} : memref<16x32xf32, #tpu.memory_space<vmem>>, vector<16x8xf32>,
    %41 = vector.extract_strided_slice %14 {offsets = [0, 8], sizes = [16, 8], strides = [1, 1]} : vector<16x32xbf16> to vector<16x8xbf16>
    %42 = vector.extract_strided_slice %15 {offsets = [0, 8], sizes = [128, 8], strides = [1, 1]} : vector<128x32xbf16> to vector<128x8xbf16>
    %cst_28 = arith.constant dense<0.000000e+00> : vector<16x128xf32>
    %43 = tpu.matmul %41, %42, %cst_28 {dimension_numbers = #tpu.dot_dimension_numbers<[1], [1], [0], [0], [0, 0, 1, 0], [], []>} : vector<16x8xbf16>, vector<128x8xbf16>, vector<16x128xf32> -> vector<16x128xf32>
    %cst_29 = arith.constant -1.000000e+30 : f32
    %44 = vector.shape_cast %19 : vector<1x128xi1> to vector<1x128xi1>
    %45 = vector.broadcast %44 : vector<1x128xi1> to vector<16x128xi1>
    %46 = vector.broadcast %cst_29 : f32 to vector<16x128xf32>
    %47 = arith.select %45, %43, %46 : vector<16x128xi1>, vector<16x128xf32>
    %cst_30 = arith.constant dense<0xFF800000> : vector<16xf32>
    %48 = vector.multi_reduction <maximumf>, %47, %cst_30 [1] : vector<16x128xf32> to vector<16xf32>
    %49 = vector.shape_cast %48 : vector<16xf32> to vector<16x1xf32>
    %50 = vector.broadcast %49 : vector<16x1xf32> to vector<16x128xf32>
    %51 = arith.subf %47, %50 : vector<16x128xf32>
    %52 = math.exp %51 : vector<16x128xf32>
    %cst_31 = arith.constant dense<0.000000e+00> : vector<16xf32>
    %53 = vector.multi_reduction <add>, %52, %cst_31 [1] : vector<16x128xf32> to vector<16xf32>
    %54 = vector.shape_cast %53 : vector<16xf32> to vector<16x1xf32>
    %55 = arith.truncf %52 : vector<16x128xf32> to vector<16x128xbf16>
    %56 = vector.extract_strided_slice %16 {offsets = [0, 8], sizes = [128, 8], strides = [1, 1]} : vector<128x32xbf16> to vector<128x8xbf16>
    %cst_32 = arith.constant dense<0.000000e+00> : vector<16x8xf32>
    %57 = tpu.matmul %55, %56, %cst_32 {dimension_numbers = #tpu.dot_dimension_numbers<[1], [0], [0], [1], [0, 0, 1, 1], [], []>} : vector<16x128xbf16>, vector<128x8xbf16>, vector<16x8xf32> -> vector<16x8xf32>
    %58 = tpu.reciprocal %54 {approx = true} : vector<16x1xf32> -> vector<16x1xf32>
    %59 = vector.broadcast %58 : vector<16x1xf32> to vector<16x8xf32>
    %60 = arith.mulf %57, %59 : vector<16x8xf32>
    %c0_33 = arith.constant 0 : index
    %c8 = arith.constant 8 : index
    %61 = vector.load %arg12[%c0_33, %c8] : memref<16x32xf32, #tpu.memory_space<vmem>>, vector<16x8xf32>
    tpu.vector_store %arg12[%c0_33, %c8], %60 {strides = array<i32>} : memref<16x32xf32, #tpu.memory_space<vmem>>, vector<16x8xf32>,
    %62 = vector.extract_strided_slice %14 {offsets = [0, 16], sizes = [16, 8], strides = [1, 1]} : vector<16x32xbf16> to vector<16x8xbf16>
    %63 = vector.extract_strided_slice %15 {offsets = [0, 16], sizes = [128, 8], strides = [1, 1]} : vector<128x32xbf16> to vector<128x8xbf16>
    %cst_34 = arith.constant dense<0.000000e+00> : vector<16x128xf32>
    %64 = tpu.matmul %62, %63, %cst_34 {dimension_numbers = #tpu.dot_dimension_numbers<[1], [1], [0], [0], [0, 0, 1, 0], [], []>} : vector<16x8xbf16>, vector<128x8xbf16>, vector<16x128xf32> -> vector<16x128xf32>
    %cst_35 = arith.constant -1.000000e+30 : f32
    %65 = vector.shape_cast %19 : vector<1x128xi1> to vector<1x128xi1>
    %66 = vector.broadcast %65 : vector<1x128xi1> to vector<16x128xi1>
    %67 = vector.broadcast %cst_35 : f32 to vector<16x128xf32>
    %68 = arith.select %66, %64, %67 : vector<16x128xi1>, vector<16x128xf32>
    %cst_36 = arith.constant dense<0xFF800000> : vector<16xf32>
    %69 = vector.multi_reduction <maximumf>, %68, %cst_36 [1] : vector<16x128xf32> to vector<16xf32>
    %70 = vector.shape_cast %69 : vector<16xf32> to vector<16x1xf32>
    %71 = vector.broadcast %70 : vector<16x1xf32> to vector<16x128xf32>
    %72 = arith.subf %68, %71 : vector<16x128xf32>
    %73 = math.exp %72 : vector<16x128xf32>
    %cst_37 = arith.constant dense<0.000000e+00> : vector<16xf32>
    %74 = vector.multi_reduction <add>, %73, %cst_37 [1] : vector<16x128xf32> to vector<16xf32>
    %75 = vector.shape_cast %74 : vector<16xf32> to vector<16x1xf32>
    %76 = arith.truncf %73 : vector<16x128xf32> to vector<16x128xbf16>
    %77 = vector.extract_strided_slice %16 {offsets = [0, 16], sizes = [128, 8], strides = [1, 1]} : vector<128x32xbf16> to vector<128x8xbf16>
    %cst_38 = arith.constant dense<0.000000e+00> : vector<16x8xf32>
    %78 = tpu.matmul %76, %77, %cst_38 {dimension_numbers = #tpu.dot_dimension_numbers<[1], [0], [0], [1], [0, 0, 1, 1], [], []>} : vector<16x128xbf16>, vector<128x8xbf16>, vector<16x8xf32> -> vector<16x8xf32>
    %79 = tpu.reciprocal %75 {approx = true} : vector<16x1xf32> -> vector<16x1xf32>
    %80 = vector.broadcast %79 : vector<16x1xf32> to vector<16x8xf32>
    %81 = arith.mulf %78, %80 : vector<16x8xf32>
    %c0_39 = arith.constant 0 : index
    %c16 = arith.constant 16 : index
    %82 = vector.load %arg12[%c0_39, %c16] : memref<16x32xf32, #tpu.memory_space<vmem>>, vector<16x8xf32>
    tpu.vector_store %arg12[%c0_39, %c16], %81 {strides = array<i32>} : memref<16x32xf32, #tpu.memory_space<vmem>>, vector<16x8xf32>,
    %83 = vector.extract_strided_slice %14 {offsets = [0, 24], sizes = [16, 8], strides = [1, 1]} : vector<16x32xbf16> to vector<16x8xbf16>
    %84 = vector.extract_strided_slice %15 {offsets = [0, 24], sizes = [128, 8], strides = [1, 1]} : vector<128x32xbf16> to vector<128x8xbf16>
    %cst_40 = arith.constant dense<0.000000e+00> : vector<16x128xf32>
    %85 = tpu.matmul %83, %84, %cst_40 {dimension_numbers = #tpu.dot_dimension_numbers<[1], [1], [0], [0], [0, 0, 1, 0], [], []>} : vector<16x8xbf16>, vector<128x8xbf16>, vector<16x128xf32> -> vector<16x128xf32>
    %cst_41 = arith.constant -1.000000e+30 : f32
    %86 = vector.shape_cast %19 : vector<1x128xi1> to vector<1x128xi1>
    %87 = vector.broadcast %86 : vector<1x128xi1> to vector<16x128xi1>
    %88 = vector.broadcast %cst_41 : f32 to vector<16x128xf32>
    %89 = arith.select %87, %85, %88 : vector<16x128xi1>, vector<16x128xf32>
    %cst_42 = arith.constant dense<0xFF800000> : vector<16xf32>
    %90 = vector.multi_reduction <maximumf>, %89, %cst_42 [1] : vector<16x128xf32> to vector<16xf32>
    %91 = vector.shape_cast %90 : vector<16xf32> to vector<16x1xf32>
    %92 = vector.broadcast %91 : vector<16x1xf32> to vector<16x128xf32>
    %93 = arith.subf %89, %92 : vector<16x128xf32>
    %94 = math.exp %93 : vector<16x128xf32>
    %cst_43 = arith.constant dense<0.000000e+00> : vector<16xf32>
    %95 = vector.multi_reduction <add>, %94, %cst_43 [1] : vector<16x128xf32> to vector<16xf32>
    %96 = vector.shape_cast %95 : vector<16xf32> to vector<16x1xf32>
    %97 = arith.truncf %94 : vector<16x128xf32> to vector<16x128xbf16>
    %98 = vector.extract_strided_slice %16 {offsets = [0, 24], sizes = [128, 8], strides = [1, 1]} : vector<128x32xbf16> to vector<128x8xbf16>
    %cst_44 = arith.constant dense<0.000000e+00> : vector<16x8xf32>
    %99 = tpu.matmul %97, %98, %cst_44 {dimension_numbers = #tpu.dot_dimension_numbers<[1], [0], [0], [1], [0, 0, 1, 1], [], []>} : vector<16x128xbf16>, vector<128x8xbf16>, vector<16x8xf32> -> vector<16x8xf32>
    %100 = tpu.reciprocal %96 {approx = true} : vector<16x1xf32> -> vector<16x1xf32>
    %101 = vector.broadcast %100 : vector<16x1xf32> to vector<16x8xf32>
    %102 = arith.mulf %99, %101 : vector<16x8xf32>
    %c0_45 = arith.constant 0 : index
    %c24 = arith.constant 24 : index
    %103 = vector.load %arg12[%c0_45, %c24] : memref<16x32xf32, #tpu.memory_space<vmem>>, vector<16x8xf32>
    tpu.vector_store %arg12[%c0_45, %c24], %102 {strides = array<i32>} : memref<16x32xf32, #tpu.memory_space<vmem>>, vector<16x8xf32>,
    %c0_46 = arith.constant 0 : index
    %c0_47 = arith.constant 0 : index
    %104 = vector.load %arg12[%c0_46, %c0_47] : memref<16x32xf32, #tpu.memory_space<vmem>>, vector<16x32xf32>
    %105 = arith.truncf %104 : vector<16x32xf32> to vector<16x32xbf16>
    %c0_48 = arith.constant 0 : index
    %c0_49 = arith.constant 0 : index
    %106 = vector.load %arg7[%c0_48, %c0_49] : memref<32x32xbf16, #tpu.memory_space<vmem>>, vector<32x32xbf16>
    %cst_50 = arith.constant dense<0.000000e+00> : vector<16x32xf32>
    %107 = tpu.matmul %105, %106, %cst_50 {dimension_numbers = #tpu.dot_dimension_numbers<[1], [0], [0], [1], [0, 0, 1, 1], [], []>} : vector<16x32xbf16>, vector<32x32xbf16>, vector<16x32xf32> -> vector<16x32xf32>
    %c0_51 = arith.constant 0 : index
    %c0_52 = arith.constant 0 : index
    %108 = vector.load %arg8[%c0_51, %c0_52] : memref<1x32xf32, #tpu.memory_space<vmem>>, vector<1x32xf32>
    %109 = vector.broadcast %108 : vector<1x32xf32> to vector<16x32xf32>
    %110 = arith.addf %107, %109 : vector<16x32xf32>
    %c0_53 = arith.constant 0 : index
    %c0_54 = arith.constant 0 : index
    %c0_55 = arith.constant 0 : index
    %111 = vector.load %arg9[%c0_53, %c0_54, %c0_55] : memref<1x16x32xf32, #tpu.memory_space<vmem>>, vector<1x16x32xf32>
    %112 = vector.shape_cast %111 : vector<1x16x32xf32> to vector<16x32xf32>
    %113 = vector.shape_cast %110 : vector<16x32xf32> to vector<1x16x32xf32>
    tpu.vector_store %arg9[%c0_53, %c0_54, %c0_55], %113 {strides = array<i32>} : memref<1x16x32xf32, #tpu.memory_space<vmem>>, vector<1x16x32xf32>,
    return
  }
  func.func @transform_0(%arg0: i32, %arg1: i32) -> (i32, i32, i32) {
    %c0_i32 = arith.constant 0 : i32
    %c0_i32_0 = arith.constant 0 : i32
    return %arg0, %arg1, %c0_i32 : i32, i32, i32
  }
  func.func @transform_1(%arg0: i32, %arg1: i32) -> (i32, i32, i32) {
    %c0_i32 = arith.constant 0 : i32
    %c0_i32_0 = arith.constant 0 : i32
    %c0_i32_1 = arith.constant 0 : i32
    return %arg0, %c0_i32, %c0_i32_0 : i32, i32, i32
  }
  func.func @transform_2(%arg0: i32, %arg1: i32) -> (i32, i32) {
    %c0_i32 = arith.constant 0 : i32
    %c0_i32_0 = arith.constant 0 : i32
    %c0_i32_1 = arith.constant 0 : i32
    return %c0_i32, %c0_i32_0 : i32, i32
  }
  func.func @transform_3(%arg0: i32, %arg1: i32) -> (i32, i32) {
    %c0_i32 = arith.constant 0 : i32
    %c0_i32_0 = arith.constant 0 : i32
    %c0_i32_1 = arith.constant 0 : i32
    return %c0_i32, %c0_i32_0 : i32, i32
  }
  func.func @transform_4(%arg0: i32, %arg1: i32) -> (i32, i32) {
    %c0_i32 = arith.constant 0 : i32
    %c0_i32_0 = arith.constant 0 : i32
    %c0_i32_1 = arith.constant 0 : i32
    return %c0_i32, %c0_i32_0 : i32, i32
  }
  func.func @transform_5(%arg0: i32, %arg1: i32) -> (i32, i32) {
    %c0_i32 = arith.constant 0 : i32
    %c0_i32_0 = arith.constant 0 : i32
    %c0_i32_1 = arith.constant 0 : i32
    return %c0_i32, %c0_i32_0 : i32, i32
  }
  func.func @transform_6(%arg0: i32, %arg1: i32) -> (i32, i32) {
    %c0_i32 = arith.constant 0 : i32
    %c0_i32_0 = arith.constant 0 : i32
    %c0_i32_1 = arith.constant 0 : i32
    return %c0_i32, %c0_i32_0 : i32, i32
  }
  func.func @transform_7(%arg0: i32, %arg1: i32) -> (i32, i32, i32) {
    %c0_i32 = arith.constant 0 : i32
    %c0_i32_0 = arith.constant 0 : i32
    return %arg0, %arg1, %c0_i32 : i32, i32, i32
  }
}

</mosaic_0001>

<llo_original>
// kernel: tpu_custom_call.1
$region0: #{tpu_custom_call.1}
  #allocation0 [shape = 'u32[]', space=smem, size = 0x4, offset = 0x4, fixed_abs, tag = 'smem constant byte address 0x4 - core index']
  #allocation1 [shape = 'u32[72,128]{1,0:T(1,128)}', space=vmem, size = 0x9000, scoped, tag = 'internal scratch']
  #allocation2 [shape = 'bf16[128,32]{1,0:T(8,128)(2,1)}', space=vmem, size = 0x8000, scoped, tag = 'scratch operand']
  #allocation3 [shape = 'bf16[128,32]{1,0:T(8,128)(2,1)}', space=vmem, size = 0x8000, scoped, tag = 'scratch operand']
  #allocation4 [shape = 'f32[16,32]{1,0:T(8,128)}', space=vmem, size = 0x2000, scoped, tag = 'scratch operand']
  %s0 = inlined_call_operand.vmem [shape: bf16[2,16,32], index: 0, kind: input, shape index: {}]
  %s1 = inlined_call_operand.vmem [shape: bf16[2,128,16], index: 1, kind: input, shape index: {}]
  %s2 = inlined_call_operand.vmem [shape: bf16[32,32], index: 2, kind: input, shape index: {}]
  %s3 = inlined_call_operand.vmem [shape: bf16[16,32], index: 3, kind: input, shape index: {}]
  %s4 = inlined_call_operand.vmem [shape: bf16[16,32], index: 4, kind: input, shape index: {}]
  %s5 = inlined_call_operand.vmem [shape: bf16[32,32], index: 5, kind: input, shape index: {}]
  %s6 = inlined_call_operand.vmem [shape: f32[1,32], index: 6, kind: input, shape index: {}]
  %s7 = inlined_call_operand.hbm [shape: f32[2,16,32], index: 7, kind: output, shape index: {}]
  %s8 = sld [smem:[#allocation0]]
  $region61: #{tpu_custom_call.1} parent=0
    _
  %s10 = ssub.s32 1, %s8
  %s11 = scalar_select 0, %s10, %s8
  $region1: #{tpu_custom_call.1} parent=0
    #allocation5 [shape = 'u8[16384]{0}', space=vmem, size = 0x4000, scoped, tag = 'output window, operand 0']
    #allocation6 [shape = 's32[2]{0}', space=sflag, size = 0x8, scoped, tag = 'scoped memory for tpu_custom_call.1']
    %12 = vsyncpa [#allocation6], 0
    %s13 = scalar_lea.sflag [#allocation6], 1
    %14 = vsyncpa %s13, 0
    loop: start=0, step=1, limit=4
    $region2: #{tpu_custom_call.1} parent=1 // loop_pre_header
      _
    $region3: #{tpu_custom_call.1} parent=1 // loop_header
      %s16 = sphi 0, %s20
      %p17 = scmp.ge.s32.totalorder %s16, 4
      %s23 = sphi 0, %s35
      %s24 = sphi 0, %s31
      %s25 = sphi 0, %s23
      %s26 = sphi 0, %s24
      %s27 = sphi 0, %s25
      %s28 = sphi 0, %s26
      %s40 = sphi 0, %s42
      %s43 = sphi 0, %s40
      %s44 = sphi 0, %s43
      %s60 = sphi 0, %s44
      %s66 = sphi 0, %s68
      %s69 = sphi 0, %s66
      %s70 = sphi 0, %s69
      %s86 = sphi 0, %s70
      %s90 = sphi 0, %s90
      %s92 = sphi 0, %s90
      %s93 = sphi 0, %s92
      %s107 = sphi 0, %s93
      %s111 = sphi 0, %s111
      %s113 = sphi 0, %s111
      %s114 = sphi 0, %s113
      %s128 = sphi 0, %s114
      %s132 = sphi 0, %s132
      %s134 = sphi 0, %s132
      %s135 = sphi 0, %s134
      %s149 = sphi 0, %s135
      %s153 = sphi 0, %s153
      %s155 = sphi 0, %s153
      %s156 = sphi 0, %s155
      %s170 = sphi 0, %s156
      %s174 = sphi 0, %s174
      %s176 = sphi 0, %s174
      %s177 = sphi 0, %s176
      %s191 = sphi 0, %s177
      %s199 = sphi 0, %s201
      %s202 = sphi 0, %s199
      %s203 = sphi 0, %s202
      %s219 = sphi 0, %s203
    $region4: #{tpu_custom_call.1} parent=1 // loop_header_branch
      %19 = sbr.rel (%p17) target = $region8
    $region5: #{tpu_custom_call.1} parent=1 // loop_body
      %s21 = ssub.s32 %s16, 1
      %s22 = ssub.s32 %s16, 2
      %s29 = sadd.s32 1, %s24
      %p30 = scmp.ge.s32.totalorder %s29, 1
      %s31 = scalar_select %p30, 0, %s29
      %s32 = sadd.s32 1, %s23
      %s33 = scalar_select %p30, %s32, %s23
      %p34 = scmp.ge.s32.totalorder %s33, 2
      %s35 = scalar_select %p34, 0, %s33
      %s36 = ssub.s32 %s23, %s35
      %s37 = ssub.s32 %s24, %s31
      %s38 = sor.u32 %s36, %s37
      %p39 = scmp.eq.s32.totalorder %s38, 0
      %s41 = sadd.s32 %s40, 1
      %s42 = scalar_select %p39, %s40, %s41
      %p45 = pneg %p39
      %p46 = scmp.eq.s32.totalorder %s16, 1
      %p47 = por %p45, %p46
      %p48 = scmp.ne.s32.totalorder %s40, %s43
      %p49 = scmp.eq.s32.totalorder %s16, 0
      %p50 = por %p48, %p49
      %p51 = scmp.ne.s32.totalorder %s40, %s43
      %p52 = scmp.eq.s32.totalorder %s21, 1
      %p53 = por %p51, %p52
      %p54 = scmp.ne.s32.totalorder %s43, %s44
      %p55 = scmp.eq.s32.totalorder %s21, 0
      %p56 = por %p54, %p55
      %p57 = scmp.ne.s32.totalorder %s43, %s44
      %p58 = scmp.eq.s32.totalorder %s22, 1
      %p59 = por %p57, %p58
      %p61 = scmp.ne.s32.totalorder %s44, %s60
      %p62 = scmp.eq.s32.totalorder %s22, 0
      %p63 = por %p61, %p62
      %s64 = ssub.s32 %s23, %s35
      %p65 = scmp.eq.s32.totalorder %s64, 0
      %s67 = sadd.s32 %s66, 1
      %s68 = scalar_select %p65, %s66, %s67
      %p71 = pneg %p65
      %p72 = scmp.eq.s32.totalorder %s16, 1
      %p73 = por %p71, %p72
      %p74 = scmp.ne.s32.totalorder %s66, %s69
      %p75 = scmp.eq.s32.totalorder %s16, 0
      %p76 = por %p74, %p75
      %p77 = scmp.ne.s32.totalorder %s66, %s69
      %p78 = scmp.eq.s32.totalorder %s21, 1
      %p79 = por %p77, %p78
      %p80 = scmp.ne.s32.totalorder %s69, %s70
      %p81 = scmp.eq.s32.totalorder %s21, 0
      %p82 = por %p80, %p81
      %p83 = scmp.ne.s32.totalorder %s69, %s70
      %p84 = scmp.eq.s32.totalorder %s22, 1
      %p85 = por %p83, %p84
      %p87 = scmp.ne.s32.totalorder %s70, %s86
      %p88 = scmp.eq.s32.totalorder %s22, 0
      %p89 = por %p87, %p88
      %s91 = sadd.s32 %s90, 1
      %p94 = scmp.eq.s32.totalorder %s16, 1
      %p95 = scmp.ne.s32.totalorder %s90, %s92
      %p96 = scmp.eq.s32.totalorder %s16, 0
      %p97 = por %p95, %p96
      %p98 = scmp.ne.s32.totalorder %s90, %s92
      %p99 = scmp.eq.s32.totalorder %s21, 1
      %p100 = por %p98, %p99
      %p101 = scmp.ne.s32.totalorder %s92, %s93
      %p102 = scmp.eq.s32.totalorder %s21, 0
      %p103 = por %p101, %p102
      %p104 = scmp.ne.s32.totalorder %s92, %s93
      %p105 = scmp.eq.s32.totalorder %s22, 1
      %p106 = por %p104, %p105
      %p108 = scmp.ne.s32.totalorder %s93, %s107
      %p109 = scmp.eq.s32.totalorder %s22, 0
      %p110 = por %p108, %p109
      %s112 = sadd.s32 %s111, 1
      %p115 = scmp.eq.s32.totalorder %s16, 1
      %p116 = scmp.ne.s32.totalorder %s111, %s113
      %p117 = scmp.eq.s32.totalorder %s16, 0
      %p118 = por %p116, %p117
      %p119 = scmp.ne.s32.totalorder %s111, %s113
      %p120 = scmp.eq.s32.totalorder %s21, 1
      %p121 = por %p119, %p120
      %p122 = scmp.ne.s32.totalorder %s113, %s114
      %p123 = scmp.eq.s32.totalorder %s21, 0
      %p124 = por %p122, %p123
      %p125 = scmp.ne.s32.totalorder %s113, %s114
      %p126 = scmp.eq.s32.totalorder %s22, 1
      %p127 = por %p125, %p126
      %p129 = scmp.ne.s32.totalorder %s114, %s128
      %p130 = scmp.eq.s32.totalorder %s22, 0
      %p131 = por %p129, %p130
      %s133 = sadd.s32 %s132, 1
      %p136 = scmp.eq.s32.totalorder %s16, 1
      %p137 = scmp.ne.s32.totalorder %s132, %s134
      %p138 = scmp.eq.s32.totalorder %s16, 0
      %p139 = por %p137, %p138
      %p140 = scmp.ne.s32.totalorder %s132, %s134
      %p141 = scmp.eq.s32.totalorder %s21, 1
      %p142 = por %p140, %p141
      %p143 = scmp.ne.s32.totalorder %s134, %s135
      %p144 = scmp.eq.s32.totalorder %s21, 0
      %p145 = por %p143, %p144
      %p146 = scmp.ne.s32.totalorder %s134, %s135
      %p147 = scmp.eq.s32.totalorder %s22, 1
      %p148 = por %p146, %p147
      %p150 = scmp.ne.s32.totalorder %s135, %s149
      %p151 = scmp.eq.s32.totalorder %s22, 0
      %p152 = por %p150, %p151
      %s154 = sadd.s32 %s153, 1
      %p157 = scmp.eq.s32.totalorder %s16, 1
      %p158 = scmp.ne.s32.totalorder %s153, %s155
      %p159 = scmp.eq.s32.totalorder %s16, 0
      %p160 = por %p158, %p159
      %p161 = scmp.ne.s32.totalorder %s153, %s155
      %p162 = scmp.eq.s32.totalorder %s21, 1
      %p163 = por %p161, %p162
      %p164 = scmp.ne.s32.totalorder %s155, %s156
      %p165 = scmp.eq.s32.totalorder %s21, 0
      %p166 = por %p164, %p165
      %p167 = scmp.ne.s32.totalorder %s155, %s156
      %p168 = scmp.eq.s32.totalorder %s22, 1
      %p169 = por %p167, %p168
      %p171 = scmp.ne.s32.totalorder %s156, %s170
      %p172 = scmp.eq.s32.totalorder %s22, 0
      %p173 = por %p171, %p172
      %s175 = sadd.s32 %s174, 1
      %p178 = scmp.eq.s32.totalorder %s16, 1
      %p179 = scmp.ne.s32.totalorder %s174, %s176
      %p180 = scmp.eq.s32.totalorder %s16, 0
      %p181 = por %p179, %p180
      %p182 = scmp.ne.s32.totalorder %s174, %s176
      %p183 = scmp.eq.s32.totalorder %s21, 1
      %p184 = por %p182, %p183
      %p185 = scmp.ne.s32.totalorder %s176, %s177
      %p186 = scmp.eq.s32.totalorder %s21, 0
      %p187 = por %p185, %p186
      %p188 = scmp.ne.s32.totalorder %s176, %s177
      %p189 = scmp.eq.s32.totalorder %s22, 1
      %p190 = por %p188, %p189
      %p192 = scmp.ne.s32.totalorder %s177, %s191
      %p193 = scmp.eq.s32.totalorder %s22, 0
      %p194 = por %p192, %p193
      %s195 = ssub.s32 %s23, %s35
      %s196 = ssub.s32 %s24, %s31
      %s197 = sor.u32 %s195, %s196
      %p198 = scmp.eq.s32.totalorder %s197, 0
      %s200 = sadd.s32 %s199, 1
      %s201 = scalar_select %p198, %s199, %s200
      %p204 = pneg %p198
      %p205 = scmp.eq.s32.totalorder %s16, 1
      %p206 = por %p204, %p205
      %p207 = scmp.ne.s32.totalorder %s199, %s202
      %p208 = scmp.eq.s32.totalorder %s16, 0
      %p209 = por %p207, %p208
      %p210 = scmp.ne.s32.totalorder %s199, %s202
      %p211 = scmp.eq.s32.totalorder %s21, 1
      %p212 = por %p210, %p211
      %p213 = scmp.ne.s32.totalorder %s202, %s203
      %p214 = scmp.eq.s32.totalorder %s21, 0
      %p215 = por %p213, %p214
      %p216 = scmp.ne.s32.totalorder %s202, %s203
      %p217 = scmp.eq.s32.totalorder %s22, 1
      %p218 = por %p216, %p217
      %p220 = scmp.ne.s32.totalorder %s203, %s219
      %p221 = scmp.eq.s32.totalorder %s22, 0
      %p222 = por %p220, %p221
      %p223 = scmp.le.s32.totalorder 1, %s16
      %p224 = scmp.lt.s32.totalorder %s16, 3
      %p225 = pnand %p223, %p224
      %p226 = pneg %p225
      // Predicated region
      $region9: #{tpu_custom_call.1} parent=5 // pred_check
        _
      $region10: #{tpu_custom_call.1} parent=5 // pred_check_branch
        %228 = sbr.rel (%p225) target = $region12
      $region11: #{tpu_custom_call.1} parent=5 // pred_region
        %s229 = ssub.s32 %s16, 1
        // Predicated region
        $region13: #{tpu_custom_call.1} parent=11 // pred_check
          %p230 = pneg %p103
        $region14: #{tpu_custom_call.1} parent=11 // pred_check_branch
          %232 = sbr.rel (%p230) target = $region16
        $region15: #{tpu_custom_call.1} parent=11 // pred_region
          _
        $region16: #{tpu_custom_call.1} parent=11 // pred_fallthru
          _
        // Predicated region
        $region17: #{tpu_custom_call.1} parent=11 // pred_check
          %p233 = pneg %p124
        $region18: #{tpu_custom_call.1} parent=11 // pred_check_branch
          %235 = sbr.rel (%p233) target = $region20
        $region19: #{tpu_custom_call.1} parent=11 // pred_region
          _
        $region20: #{tpu_custom_call.1} parent=11 // pred_fallthru
          _
        // Predicated region
        $region21: #{tpu_custom_call.1} parent=11 // pred_check
          %p236 = pneg %p145
        $region22: #{tpu_custom_call.1} parent=11 // pred_check_branch
          %238 = sbr.rel (%p236) target = $region24
        $region23: #{tpu_custom_call.1} parent=11 // pred_region
          _
        $region24: #{tpu_custom_call.1} parent=11 // pred_fallthru
          _
        // Predicated region
        $region25: #{tpu_custom_call.1} parent=11 // pred_check
          %p239 = pneg %p166
        $region26: #{tpu_custom_call.1} parent=11 // pred_check_branch
          %241 = sbr.rel (%p239) target = $region28
        $region27: #{tpu_custom_call.1} parent=11 // pred_region
          _
        $region28: #{tpu_custom_call.1} parent=11 // pred_fallthru
          _
        // Predicated region
        $region29: #{tpu_custom_call.1} parent=11 // pred_check
          %p242 = pneg %p187
        $region30: #{tpu_custom_call.1} parent=11 // pred_check_branch
          %244 = sbr.rel (%p242) target = $region32
        $region31: #{tpu_custom_call.1} parent=11 // pred_region
          _
        $region32: #{tpu_custom_call.1} parent=11 // pred_fallthru
          _
      $region12: #{tpu_custom_call.1} parent=5 // pred_fallthru
        _
      %p245 = scmp.lt.s32.totalorder %s16, 2
      // Predicated region
      $region33: #{tpu_custom_call.1} parent=5 // pred_check
        %p246 = pneg %p245
      $region34: #{tpu_custom_call.1} parent=5 // pred_check_branch
        %248 = sbr.rel (%p246) target = $region36
      $region35: #{tpu_custom_call.1} parent=5 // pred_region
        // Predicated region
        $region37: #{tpu_custom_call.1} parent=35 // pred_check
          %p249 = pneg %p50
        $region38: #{tpu_custom_call.1} parent=35 // pred_check_branch
          %251 = sbr.rel (%p249) target = $region40
        $region39: #{tpu_custom_call.1} parent=35 // pred_region
          %s252 = smul.u32 2, %s24
          %p253 = scmp.lt.s32.totalorder %s23, 1
          %s254 = scalar_select %p253, %s23, 1
          %p255 = scmp.lt.s32.totalorder %s252, 1
          %s256 = scalar_select %p255, %s252, 1
          %s257 = smul.addr %s254, 2
          %s258 = sadd.s32 %s256, %s257
          %s259 = smul.addr %s258, 4
          %s260 = scalar_lea.vmem %s0, %s259
          %s261 = smul.u32 2, %s24
        $region40: #{tpu_custom_call.1} parent=35 // pred_fallthru
          _
        // Predicated region
        $region41: #{tpu_custom_call.1} parent=35 // pred_check
          %p262 = pneg %p76
        $region42: #{tpu_custom_call.1} parent=35 // pred_check_branch
          %264 = sbr.rel (%p262) target = $region44
        $region43: #{tpu_custom_call.1} parent=35 // pred_region
          %p265 = scmp.lt.s32.totalorder %s23, 1
          %s266 = scalar_select %p265, %s23, 1
          %s267 = smul.addr %s266, 16
          %s268 = smul.addr %s267, 4
          %s269 = scalar_lea.vmem %s1, %s268
        $region44: #{tpu_custom_call.1} parent=35 // pred_fallthru
          _
      $region36: #{tpu_custom_call.1} parent=5 // pred_fallthru
        _
      %p270 = scmp.le.s32.totalorder 1, %s16
      %p271 = scmp.lt.s32.totalorder %s16, 3
      %p272 = pnand %p270, %p271
      %p273 = pneg %p272
      // Predicated region
      $region45: #{tpu_custom_call.1} parent=5 // pred_check
        _
      $region46: #{tpu_custom_call.1} parent=5 // pred_check_branch
        %275 = sbr.rel (%p272) target = $region48
      $region47: #{tpu_custom_call.1} parent=5 // pred_region
        %s276 = ssub.s32 %s16, 1
        %s277 = smul.u32 2, %s26
        %p278 = scmp.lt.s32.totalorder %s25, 1
        %s279 = scalar_select %p278, %s25, 1
        %p280 = scmp.lt.s32.totalorder %s277, 1
        %s281 = scalar_select %p280, %s277, 1
        %s282 = smul.addr %s279, 2
        %s283 = sadd.s32 %s281, %s282
        %s284 = smul.addr %s283, 4
        %s285 = scalar_lea.vmem %s0, %s284
        %p286 = pneg %p56
        %p287 = pneg %p53
        %p288 = scmp.lt.s32.totalorder %s25, 1
        %s289 = scalar_select %p288, %s25, 1
        %s290 = smul.addr %s289, 16
        %s291 = smul.addr %s290, 4
        %s292 = scalar_lea.vmem %s1, %s291
        %p293 = pneg %p82
        %p294 = pneg %p79
        %p295 = pneg %p103
        %p296 = pneg %p100
        %p297 = pneg %p124
        %p298 = pneg %p121
        %p299 = pneg %p145
        %p300 = pneg %p142
        %p301 = pneg %p166
        %p302 = pneg %p163
        %p303 = pneg %p187
        %p304 = pneg %p184
        %p305 = pneg %p215
        %p306 = pneg %p212
        %s307 = sand.u32 %s202, 1
        %s308 = scalar_lea.sflag [#allocation6], %s307
        %s309 = sand.u32 %s202, 1
        %s310 = smul.addr %s309, 16
        %s311 = scalar_lea.vmem [#allocation5], %s310
        %s312 = smul.u32 2, %s26
        %p313 = scmp.lt.s32.totalorder %s25, 1
        %s314 = scalar_select %p313, %s25, 1
        %p315 = scmp.lt.s32.totalorder %s312, 1
        %s316 = scalar_select %p315, %s312, 1
        %s317 = smul.addr %s314, 2
        %s318 = sadd.s32 %s316, %s317
        %s319 = smul.addr %s318, 4
        %s320 = scalar_lea.vmem %s0, %s319
        %s321 = smul.u32 2, %s26
        %p322 = scmp.lt.s32.totalorder %s25, 1
        %s323 = scalar_select %p322, %s25, 1
        %s324 = smul.addr %s323, 16
        %s325 = smul.addr %s324, 4
        %s326 = scalar_lea.vmem %s1, %s325
        %s327 = smul.u32 2, %s26
        %v329 = vld [vmem:[%s326] sm:$0xf]
        %v330 = vld [vmem:[%s326 + $0x4] sm:$0xf]
        %v331 = vld [vmem:[%s326 + $0x8] sm:$0xf]
        %v332 = vld [vmem:[%s326 + $0xc] sm:$0xf]
        %v333 = vld [vmem:[%s326 + $0x10] sm:$0xf]
        %v334 = vld [vmem:[%s326 + $0x14] sm:$0xf]
        %v335 = vld [vmem:[%s326 + $0x18] sm:$0xf]
        %v336 = vld [vmem:[%s326 + $0x1c] sm:$0xf]
        %v337 = vld [vmem:[%s326 + $0x20] sm:$0xf]
        %v338 = vld [vmem:[%s326 + $0x24] sm:$0xf]
        %v339 = vld [vmem:[%s326 + $0x28] sm:$0xf]
        %v340 = vld [vmem:[%s326 + $0x2c] sm:$0xf]
        %v341 = vld [vmem:[%s326 + $0x30] sm:$0xf]
        %v342 = vld [vmem:[%s326 + $0x34] sm:$0xf]
        %v343 = vld [vmem:[%s326 + $0x38] sm:$0xf]
        %v344 = vld [vmem:[%s326 + $0x3c] sm:$0xf]
        %v345 = vld [vmem:[%s3] sm:$0xf]
        %v346 = vld [vmem:[%s3 + $0x4] sm:$0xf]
        %v363 = vunpack.c.l.b16 %v329
        %v364 = vunpack.c.l.b16 %v330
        %v365 = vunpack.c.l.b16 %v331
        %v366 = vunpack.c.l.b16 %v332
        %v367 = vunpack.c.l.b16 %v333
        %v368 = vunpack.c.l.b16 %v334
        %v369 = vunpack.c.l.b16 %v335
        %v370 = vunpack.c.l.b16 %v336
        %v371 = vunpack.c.l.b16 %v337
        %v372 = vunpack.c.l.b16 %v338
        %v373 = vunpack.c.l.b16 %v339
        %v374 = vunpack.c.l.b16 %v340
        %v375 = vunpack.c.l.b16 %v341
        %v376 = vunpack.c.l.b16 %v342
        %v377 = vunpack.c.l.b16 %v343
        %v378 = vunpack.c.l.b16 %v344
        %v379 = vpack.c.b16 %v364, %v363
        %v380 = vpack.c.b16 %v366, %v365
        %v381 = vpack.c.b16 %v368, %v367
        %v382 = vpack.c.b16 %v370, %v369
        %v383 = vpack.c.b16 %v372, %v371
        %v384 = vpack.c.b16 %v374, %v373
        %v385 = vpack.c.b16 %v376, %v375
        %v386 = vpack.c.b16 %v378, %v377
        %v389 = vunpack.c.l.b16 %v345
        %v390 = vunpack.c.l.b16 %v346
        %v391 = vpack.c.b16 %v390, %v389
        %vm393 = vcmask 130048
        %v395 = vsel %vm393, %v379, 0
        %v398 = vsel %vm393, %v380, 0
        %v401 = vsel %vm393, %v381, 0
        %v404 = vsel %vm393, %v382, 0
        %v407 = vsel %vm393, %v383, 0
        %v410 = vsel %vm393, %v384, 0
        %v413 = vsel %vm393, %v385, 0
        %v416 = vsel %vm393, %v386, 0
        %418 = vmatpush.bf16.msra.mxu0 0
        %419 = vmatpush.bf16.msra.mxu0 0
        %420 = vmatpush.bf16.msra.mxu0 0
        %421 = vmatpush.bf16.msra.mxu0 0
        %422 = vmatpush.bf16.msra.mxu0 0
        %423 = vmatpush.bf16.msra.mxu0 0
        %424 = vmatpush.bf16.msra.mxu0 0
        %425 = vmatpush.bf16.msra.mxu0 %v391
        %426 = vmatmul.bf16.gmra.mxu0 %v395
        %v427 = vpop.f32.mrf.mxu0
        %v428 = vadd.f32 0.0, %v427
        %v429 = vpop.f32.mrf.mxu0
        %v430 = vadd.f32 0.0, %v429
        %431 = vmatmul.bf16.gmra.mxu0 %v398
        %v432 = vpop.f32.mrf.mxu0
        %v433 = vadd.f32 0.0, %v432
        %v434 = vpop.f32.mrf.mxu0
        %v435 = vadd.f32 0.0, %v434
        %436 = vmatmul.bf16.gmra.mxu0 %v401
        %v437 = vpop.f32.mrf.mxu0
        %v438 = vadd.f32 0.0, %v437
        %v439 = vpop.f32.mrf.mxu0
        %v440 = vadd.f32 0.0, %v439
        %441 = vmatmul.bf16.gmra.mxu0 %v404
        %v442 = vpop.f32.mrf.mxu0
        %v443 = vadd.f32 0.0, %v442
        %v444 = vpop.f32.mrf.mxu0
        %v445 = vadd.f32 0.0, %v444
        %446 = vmatmul.bf16.gmra.mxu0 %v407
        %v447 = vpop.f32.mrf.mxu0
        %v448 = vadd.f32 0.0, %v447
        %v449 = vpop.f32.mrf.mxu0
        %v450 = vadd.f32 0.0, %v449
        %451 = vmatmul.bf16.gmra.mxu0 %v410
        %v452 = vpop.f32.mrf.mxu0
        %v453 = vadd.f32 0.0, %v452
        %v454 = vpop.f32.mrf.mxu0
        %v455 = vadd.f32 0.0, %v454
        %456 = vmatmul.bf16.gmra.mxu0 %v413
        %v457 = vpop.f32.mrf.mxu0
        %v458 = vadd.f32 0.0, %v457
        %v459 = vpop.f32.mrf.mxu0
        %v460 = vadd.f32 0.0, %v459
        %461 = vmatmul.bf16.gmra.mxu0 %v416
        %v462 = vpop.f32.mrf.mxu0
        %v463 = vadd.f32 0.0, %v462
        %v464 = vpop.f32.mrf.mxu0
        %v465 = vadd.f32 0.0, %v464
        %466 = vdwg.mxu0
        %v467 = vpack.c.bf16 %v428, %v428
        %v468 = vpack.c.bf16 %v430, %v430
        %v469 = vpack.c.bf16 %v433, %v433
        %v470 = vpack.c.bf16 %v435, %v435
        %v471 = vpack.c.bf16 %v438, %v438
        %v472 = vpack.c.bf16 %v440, %v440
        %v473 = vpack.c.bf16 %v443, %v443
        %v474 = vpack.c.bf16 %v445, %v445
        %v475 = vpack.c.bf16 %v448, %v448
        %v476 = vpack.c.bf16 %v450, %v450
        %v477 = vpack.c.bf16 %v453, %v453
        %v478 = vpack.c.bf16 %v455, %v455
        %v479 = vpack.c.bf16 %v458, %v458
        %v480 = vpack.c.bf16 %v460, %v460
        %v481 = vpack.c.bf16 %v463, %v463
        %v482 = vpack.c.bf16 %v465, %v465
        %vm483 = vcmask 257024
        %484 = vst.msk [vmem:[#allocation2] sm:$0xf] %vm483, %v467
        %485 = vst.msk [vmem:[#allocation2 + $0x4] sm:$0xf] %vm483, %v468
        %486 = vst.msk [vmem:[#allocation2 + $0x8] sm:$0xf] %vm483, %v469
        %487 = vst.msk [vmem:[#allocation2 + $0xc] sm:$0xf] %vm483, %v470
        %488 = vst.msk [vmem:[#allocation2 + $0x10] sm:$0xf] %vm483, %v471
        %489 = vst.msk [vmem:[#allocation2 + $0x14] sm:$0xf] %vm483, %v472
        %490 = vst.msk [vmem:[#allocation2 + $0x18] sm:$0xf] %vm483, %v473
        %491 = vst.msk [vmem:[#allocation2 + $0x1c] sm:$0xf] %vm483, %v474
        %492 = vst.msk [vmem:[#allocation2 + $0x20] sm:$0xf] %vm483, %v475
        %493 = vst.msk [vmem:[#allocation2 + $0x24] sm:$0xf] %vm483, %v476
        %494 = vst.msk [vmem:[#allocation2 + $0x28] sm:$0xf] %vm483, %v477
        %495 = vst.msk [vmem:[#allocation2 + $0x2c] sm:$0xf] %vm483, %v478
        %496 = vst.msk [vmem:[#allocation2 + $0x30] sm:$0xf] %vm483, %v479
        %497 = vst.msk [vmem:[#allocation2 + $0x34] sm:$0xf] %vm483, %v480
        %498 = vst.msk [vmem:[#allocation2 + $0x38] sm:$0xf] %vm483, %v481
        %499 = vst.msk [vmem:[#allocation2 + $0x3c] sm:$0xf] %vm483, %v482
        %v500 = vld [vmem:[%s4] sm:$0xf]
        %v501 = vld [vmem:[%s4 + $0x4] sm:$0xf]
        %v504 = vunpack.c.l.b16 %v500
        %v505 = vunpack.c.l.b16 %v501
        %v506 = vpack.c.b16 %v505, %v504
        %508 = vmatpush.bf16.msra.mxu0 0
        %509 = vmatpush.bf16.msra.mxu0 0
        %510 = vmatpush.bf16.msra.mxu0 0
        %511 = vmatpush.bf16.msra.mxu0 0
        %512 = vmatpush.bf16.msra.mxu0 0
        %513 = vmatpush.bf16.msra.mxu0 0
        %514 = vmatpush.bf16.msra.mxu0 0
        %515 = vmatpush.bf16.msra.mxu0 %v506
        %516 = vmatmul.bf16.gmra.mxu0 %v395
        %v517 = vpop.f32.mrf.mxu0
        %v518 = vadd.f32 0.0, %v517
        %v519 = vpop.f32.mrf.mxu0
        %v520 = vadd.f32 0.0, %v519
        %521 = vmatmul.bf16.gmra.mxu0 %v398
        %v522 = vpop.f32.mrf.mxu0
        %v523 = vadd.f32 0.0, %v522
        %v524 = vpop.f32.mrf.mxu0
        %v525 = vadd.f32 0.0, %v524
        %526 = vmatmul.bf16.gmra.mxu0 %v401
        %v527 = vpop.f32.mrf.mxu0
        %v528 = vadd.f32 0.0, %v527
        %v529 = vpop.f32.mrf.mxu0
        %v530 = vadd.f32 0.0, %v529
        %531 = vmatmul.bf16.gmra.mxu0 %v404
        %v532 = vpop.f32.mrf.mxu0
        %v533 = vadd.f32 0.0, %v532
        %v534 = vpop.f32.mrf.mxu0
        %v535 = vadd.f32 0.0, %v534
        %536 = vmatmul.bf16.gmra.mxu0 %v407
        %v537 = vpop.f32.mrf.mxu0
        %v538 = vadd.f32 0.0, %v537
        %v539 = vpop.f32.mrf.mxu0
        %v540 = vadd.f32 0.0, %v539
        %541 = vmatmul.bf16.gmra.mxu0 %v410
        %v542 = vpop.f32.mrf.mxu0
        %v543 = vadd.f32 0.0, %v542
        %v544 = vpop.f32.mrf.mxu0
        %v545 = vadd.f32 0.0, %v544
        %546 = vmatmul.bf16.gmra.mxu0 %v413
        %v547 = vpop.f32.mrf.mxu0
        %v548 = vadd.f32 0.0, %v547
        %v549 = vpop.f32.mrf.mxu0
        %v550 = vadd.f32 0.0, %v549
        %551 = vmatmul.bf16.gmra.mxu0 %v416
        %v552 = vpop.f32.mrf.mxu0
        %v553 = vadd.f32 0.0, %v552
        %v554 = vpop.f32.mrf.mxu0
        %v555 = vadd.f32 0.0, %v554
        %556 = vdwg.mxu0
        %v557 = vpack.c.bf16 %v518, %v518
        %v558 = vpack.c.bf16 %v520, %v520
        %v559 = vpack.c.bf16 %v523, %v523
        %v560 = vpack.c.bf16 %v525, %v525
        %v561 = vpack.c.bf16 %v528, %v528
        %v562 = vpack.c.bf16 %v530, %v530
        %v563 = vpack.c.bf16 %v533, %v533
        %v564 = vpack.c.bf16 %v535, %v535
        %v565 = vpack.c.bf16 %v538, %v538
        %v566 = vpack.c.bf16 %v540, %v540
        %v567 = vpack.c.bf16 %v543, %v543
        %v568 = vpack.c.bf16 %v545, %v545
        %v569 = vpack.c.bf16 %v548, %v548
        %v570 = vpack.c.bf16 %v550, %v550
        %v571 = vpack.c.bf16 %v553, %v553
        %v572 = vpack.c.bf16 %v555, %v555
        %573 = vst.msk [vmem:[#allocation3] sm:$0xf] %vm483, %v557
        %574 = vst.msk [vmem:[#allocation3 + $0x4] sm:$0xf] %vm483, %v558
        %575 = vst.msk [vmem:[#allocation3 + $0x8] sm:$0xf] %vm483, %v559
        %576 = vst.msk [vmem:[#allocation3 + $0xc] sm:$0xf] %vm483, %v560
        %577 = vst.msk [vmem:[#allocation3 + $0x10] sm:$0xf] %vm483, %v561
        %578 = vst.msk [vmem:[#allocation3 + $0x14] sm:$0xf] %vm483, %v562
        %579 = vst.msk [vmem:[#allocation3 + $0x18] sm:$0xf] %vm483, %v563
        %580 = vst.msk [vmem:[#allocation3 + $0x1c] sm:$0xf] %vm483, %v564
        %581 = vst.msk [vmem:[#allocation3 + $0x20] sm:$0xf] %vm483, %v565
        %582 = vst.msk [vmem:[#allocation3 + $0x24] sm:$0xf] %vm483, %v566
        %583 = vst.msk [vmem:[#allocation3 + $0x28] sm:$0xf] %vm483, %v567
        %584 = vst.msk [vmem:[#allocation3 + $0x2c] sm:$0xf] %vm483, %v568
        %585 = vst.msk [vmem:[#allocation3 + $0x30] sm:$0xf] %vm483, %v569
        %586 = vst.msk [vmem:[#allocation3 + $0x34] sm:$0xf] %vm483, %v570
        %587 = vst.msk [vmem:[#allocation3 + $0x38] sm:$0xf] %vm483, %v571
        %588 = vst.msk [vmem:[#allocation3 + $0x3c] sm:$0xf] %vm483, %v572
        %v589 = vld [vmem:[%s320] sm:$0xf]
        %v590 = vld [vmem:[%s320 + $0x4] sm:$0xf]
        %v591 = vld [vmem:[%s2] sm:$0xf]
        %v592 = vld [vmem:[%s2 + $0x4] sm:$0xf]
        %v593 = vld [vmem:[%s2 + $0x8] sm:$0xf]
        %v594 = vld [vmem:[%s2 + $0xc] sm:$0xf]
        %v597 = vunpack.c.l.b16 %v589
        %v598 = vunpack.c.l.b16 %v590
        %v599 = vpack.c.b16 %v598, %v597
        %v604 = vunpack.c.l.b16 %v591
        %v605 = vunpack.c.l.b16 %v592
        %v606 = vunpack.c.l.b16 %v593
        %v607 = vunpack.c.l.b16 %v594
        %v608 = vpack.c.b16 %v605, %v604
        %v609 = vpack.c.b16 %v607, %v606
        %vm612 = vcmask 261120
        %v614 = vsel %vm612, %v599, 0
        %616 = vmatpush.bf16.msra.mxu0 0
        %617 = vmatpush.bf16.msra.mxu0 0
        %618 = vmatpush.bf16.msra.mxu0 0
        %619 = vmatpush.bf16.msra.mxu0 0
        %620 = vmatpush.bf16.msra.mxu0 0
        %621 = vmatpush.bf16.msra.mxu0 0
        %622 = vmatpush.bf16.msra.mxu0 %v609
        %623 = vmatpush.bf16.msra.mxu0 %v608
        %624 = vmatmul.bf16.gmra.mxu0 %v614
        %v625 = vpop.f32.mrf.mxu0
        %v626 = vadd.f32 0.0, %v625
        %v627 = vpop.f32.mrf.mxu0
        %v628 = vadd.f32 0.0, %v627
        %629 = vdwg.mxu0
        %v630 = vpack.c.bf16 %v626, %v626
        %v631 = vpack.c.bf16 %v628, %v628
        %v632 = vld [vmem:[#allocation2] sm:$0xf]
        %v633 = vld [vmem:[#allocation2 + $0x4] sm:$0xf]
        %v634 = vld [vmem:[#allocation2 + $0x8] sm:$0xf]
        %v635 = vld [vmem:[#allocation2 + $0xc] sm:$0xf]
        %v636 = vld [vmem:[#allocation2 + $0x10] sm:$0xf]
        %v637 = vld [vmem:[#allocation2 + $0x14] sm:$0xf]
        %v638 = vld [vmem:[#allocation2 + $0x18] sm:$0xf]
        %v639 = vld [vmem:[#allocation2 + $0x1c] sm:$0xf]
        %v640 = vld [vmem:[#allocation2 + $0x20] sm:$0xf]
        %v641 = vld [vmem:[#allocation2 + $0x24] sm:$0xf]
        %v642 = vld [vmem:[#allocation2 + $0x28] sm:$0xf]
        %v643 = vld [vmem:[#allocation2 + $0x2c] sm:$0xf]
        %v644 = vld [vmem:[#allocation2 + $0x30] sm:$0xf]
        %v645 = vld [vmem:[#allocation2 + $0x34] sm:$0xf]
        %v646 = vld [vmem:[#allocation2 + $0x38] sm:$0xf]
        %v647 = vld [vmem:[#allocation2 + $0x3c] sm:$0xf]
        %v648 = vld [vmem:[#allocation3] sm:$0xf]
        %v649 = vld [vmem:[#allocation3 + $0x4] sm:$0xf]
        %v650 = vld [vmem:[#allocation3 + $0x8] sm:$0xf]
        %v651 = vld [vmem:[#allocation3 + $0xc] sm:$0xf]
        %v652 = vld [vmem:[#allocation3 + $0x10] sm:$0xf]
        %v653 = vld [vmem:[#allocation3 + $0x14] sm:$0xf]
        %v654 = vld [vmem:[#allocation3 + $0x18] sm:$0xf]
        %v655 = vld [vmem:[#allocation3 + $0x1c] sm:$0xf]
        %v656 = vld [vmem:[#allocation3 + $0x20] sm:$0xf]
        %v657 = vld [vmem:[#allocation3 + $0x24] sm:$0xf]
        %v658 = vld [vmem:[#allocation3 + $0x28] sm:$0xf]
        %v659 = vld [vmem:[#allocation3 + $0x2c] sm:$0xf]
        %v660 = vld [vmem:[#allocation3 + $0x30] sm:$0xf]
        %v661 = vld [vmem:[#allocation3 + $0x34] sm:$0xf]
        %v662 = vld [vmem:[#allocation3 + $0x38] sm:$0xf]
        %v663 = vld [vmem:[#allocation3 + $0x3c] sm:$0xf]
        %v664 = vlaneseq
        %v665 = vand.u32 %v664, 127
        %vm666 = vcmp.lt.s32.totalorder %v665, 8
        %v669 = vunpack.c.l.b16 %v630
        %v670 = vunpack.c.l.b16 %v631
        %v671 = vpack.c.b16 %v670, %v669
        %v688 = vunpack.c.l.b16 %v632
        %v689 = vunpack.c.l.b16 %v633
        %v690 = vunpack.c.l.b16 %v634
        %v691 = vunpack.c.l.b16 %v635
        %v692 = vunpack.c.l.b16 %v636
        %v693 = vunpack.c.l.b16 %v637
        %v694 = vunpack.c.l.b16 %v638
        %v695 = vunpack.c.l.b16 %v639
        %v696 = vunpack.c.l.b16 %v640
        %v697 = vunpack.c.l.b16 %v641
        %v698 = vunpack.c.l.b16 %v642
        %v699 = vunpack.c.l.b16 %v643
        %v700 = vunpack.c.l.b16 %v644
        %v701 = vunpack.c.l.b16 %v645
        %v702 = vunpack.c.l.b16 %v646
        %v703 = vunpack.c.l.b16 %v647
        %v704 = vpack.c.b16 %v689, %v688
        %v705 = vpack.c.b16 %v691, %v690
        %v706 = vpack.c.b16 %v693, %v692
        %v707 = vpack.c.b16 %v695, %v694
        %v708 = vpack.c.b16 %v697, %v696
        %v709 = vpack.c.b16 %v699, %v698
        %v710 = vpack.c.b16 %v701, %v700
        %v711 = vpack.c.b16 %v703, %v702
        %vm712 = vcmask 64512
        %v714 = vsel %vm712, %v671, 0
        %v717 = vsel %vm712, %v704, 0
        %v720 = vsel %vm712, %v705, 0
        %v723 = vsel %vm712, %v706, 0
        %v726 = vsel %vm712, %v707, 0
        %v729 = vsel %vm712, %v708, 0
        %v732 = vsel %vm712, %v709, 0
        %v735 = vsel %vm712, %v710, 0
        %v738 = vsel %vm712, %v711, 0
        %740 = vmatpush.bf16.xpose.msra.mxu0 %v738
        %741 = vmatpush.bf16.xpose.msra.mxu0 %v735
        %742 = vmatpush.bf16.xpose.msra.mxu0 %v732
        %743 = vmatpush.bf16.xpose.msra.mxu0 %v729
        %744 = vmatpush.bf16.xpose.msra.mxu0 %v726
        %745 = vmatpush.bf16.xpose.msra.mxu0 %v723
        %746 = vmatpush.bf16.xpose.msra.mxu0 %v720
        %747 = vmatpush.bf16.xpose.msra.mxu0 %v717
        %748 = vmatmul.bf16.gmra.mxu0 %v714
        %v749 = vpop.f32.mrf.mxu0
        %v750 = vadd.f32 0.0, %v749
        %v751 = vpop.f32.mrf.mxu0
        %v752 = vadd.f32 0.0, %v751
        %753 = vdwg.mxu0
        %v754 = vsel %vm666, 1, 0
        %vm755 = vcmp.eq.s32.totalorder %v754, 1
        %v756 = vsel %vm755, %v750, -1e+30
        %v757 = vsel %vm755, %v752, -1e+30
        %758 = vmax.xlane.f32.xlu0 %v756
        %v759 = vpop.xlane.xlu0 %758
        %760 = vmax.xlane.f32.xlu0 %v757
        %v761 = vpop.xlane.xlu0 %760
        %v762 = vsub.f32 %v756, %v759
        %v763 = vsub.f32 %v757, %v761
        %v764 = vmul.f32 %v762, 1.442695
        %v765 = vpow.pop %v764
        %v766 = vmul.f32 %v763, 1.442695
        %v767 = vpow.pop %v766
        %768 = vadd.xlane.f32.xlu0 %v765
        %v769 = vpop.xlane.xlu0 %768
        %770 = vadd.xlane.f32.xlu0 %v767
        %v771 = vpop.xlane.xlu0 %770
        %v772 = vpack.c.bf16 %v767, %v765
        %v789 = vunpack.c.l.b16 %v648
        %v790 = vunpack.c.l.b16 %v649
        %v791 = vunpack.c.l.b16 %v650
        %v792 = vunpack.c.l.b16 %v651
        %v793 = vunpack.c.l.b16 %v652
        %v794 = vunpack.c.l.b16 %v653
        %v795 = vunpack.c.l.b16 %v654
        %v796 = vunpack.c.l.b16 %v655
        %v797 = vunpack.c.l.b16 %v656
        %v798 = vunpack.c.l.b16 %v657
        %v799 = vunpack.c.l.b16 %v658
        %v800 = vunpack.c.l.b16 %v659
        %v801 = vunpack.c.l.b16 %v660
        %v802 = vunpack.c.l.b16 %v661
        %v803 = vunpack.c.l.b16 %v662
        %v804 = vunpack.c.l.b16 %v663
        %v805 = vpack.c.b16 %v790, %v789
        %v806 = vpack.c.b16 %v792, %v791
        %v807 = vpack.c.b16 %v794, %v793
        %v808 = vpack.c.b16 %v796, %v795
        %v809 = vpack.c.b16 %v798, %v797
        %v810 = vpack.c.b16 %v800, %v799
        %v811 = vpack.c.b16 %v802, %v801
        %v812 = vpack.c.b16 %v804, %v803
        %821 = vmatpush.bf16.msra.mxu0 %v812
        %822 = vmatpush.bf16.msra.mxu0 %v811
        %823 = vmatpush.bf16.msra.mxu0 %v810
        %824 = vmatpush.bf16.msra.mxu0 %v809
        %825 = vmatpush.bf16.msra.mxu0 %v808
        %826 = vmatpush.bf16.msra.mxu0 %v807
        %827 = vmatpush.bf16.msra.mxu0 %v806
        %828 = vmatpush.bf16.msra.mxu0 %v805
        %829 = vmatmul.bf16.gmra.mxu0 %v772
        %v830 = vpop.f32.mrf.mxu0
        %v831 = vadd.f32 0.0, %v830
        %v832 = vpop.f32.mrf.mxu0
        %v833 = vadd.f32 0.0, %v832
        %834 = vdwg.mxu0
        %v835 = vrcp.pop %v769
        %v836 = vrcp.pop %v771
        %v837 = vmul.f32 %v831, %v835
        %v838 = vmul.f32 %v833, %v836
        %839 = vst.msk [vmem:[#allocation4] sm:$0xff] %vm712, %v837
        %840 = vst.msk [vmem:[#allocation4 + $0x8] sm:$0xff] %vm712, %v838
        %841 = vrot.lane.b32.xlu0 %v671, 120
        %v842 = vpop.permute.xlu0 %841
        %843 = vrot.lane.b32.xlu0 %v704, 120
        %v844 = vpop.permute.xlu0 %843
        %845 = vrot.lane.b32.xlu0 %v705, 120
        %v846 = vpop.permute.xlu0 %845
        %847 = vrot.lane.b32.xlu0 %v706, 120
        %v848 = vpop.permute.xlu0 %847
        %849 = vrot.lane.b32.xlu0 %v707, 120
        %v850 = vpop.permute.xlu0 %849
        %851 = vrot.lane.b32.xlu0 %v708, 120
        %v852 = vpop.permute.xlu0 %851
        %853 = vrot.lane.b32.xlu0 %v709, 120
        %v854 = vpop.permute.xlu0 %853
        %855 = vrot.lane.b32.xlu0 %v710, 120
        %v856 = vpop.permute.xlu0 %855
        %857 = vrot.lane.b32.xlu0 %v711, 120
        %v858 = vpop.permute.xlu0 %857
        %v860 = vsel %vm712, %v842, 0
        %v863 = vsel %vm712, %v844, 0
        %v866 = vsel %vm712, %v846, 0
        %v869 = vsel %vm712, %v848, 0
        %v872 = vsel %vm712, %v850, 0
        %v875 = vsel %vm712, %v852, 0
        %v878 = vsel %vm712, %v854, 0
        %v881 = vsel %vm712, %v856, 0
        %v884 = vsel %vm712, %v858, 0
        %886 = vmatpush.bf16.xpose.msra.mxu0 %v884
        %887 = vmatpush.bf16.xpose.msra.mxu0 %v881
        %888 = vmatpush.bf16.xpose.msra.mxu0 %v878
        %889 = vmatpush.bf16.xpose.msra.mxu0 %v875
        %890 = vmatpush.bf16.xpose.msra.mxu0 %v872
        %891 = vmatpush.bf16.xpose.msra.mxu0 %v869
        %892 = vmatpush.bf16.xpose.msra.mxu0 %v866
        %893 = vmatpush.bf16.xpose.msra.mxu0 %v863
        %894 = vmatmul.bf16.gmra.mxu0 %v860
        %v895 = vpop.f32.mrf.mxu0
        %v896 = vadd.f32 0.0, %v895
        %v897 = vpop.f32.mrf.mxu0
        %v898 = vadd.f32 0.0, %v897
        %899 = vdwg.mxu0
        %v900 = vsel %vm755, %v896, -1e+30
        %v901 = vsel %vm755, %v898, -1e+30
        %902 = vmax.xlane.f32.xlu0 %v900
        %v903 = vpop.xlane.xlu0 %902
        %904 = vmax.xlane.f32.xlu0 %v901
        %v905 = vpop.xlane.xlu0 %904
        %v906 = vsub.f32 %v900, %v903
        %v907 = vsub.f32 %v901, %v905
        %v908 = vmul.f32 %v906, 1.442695
        %v909 = vpow.pop %v908
        %v910 = vmul.f32 %v907, 1.442695
        %v911 = vpow.pop %v910
        %912 = vadd.xlane.f32.xlu0 %v909
        %v913 = vpop.xlane.xlu0 %912
        %914 = vadd.xlane.f32.xlu0 %v911
        %v915 = vpop.xlane.xlu0 %914
        %v916 = vpack.c.bf16 %v911, %v909
        %917 = vrot.lane.b32.xlu0 %v805, 120
        %v918 = vpop.permute.xlu0 %917
        %919 = vrot.lane.b32.xlu0 %v806, 120
        %v920 = vpop.permute.xlu0 %919
        %921 = vrot.lane.b32.xlu0 %v807, 120
        %v922 = vpop.permute.xlu0 %921
        %923 = vrot.lane.b32.xlu0 %v808, 120
        %v924 = vpop.permute.xlu0 %923
        %925 = vrot.lane.b32.xlu0 %v809, 120
        %v926 = vpop.permute.xlu0 %925
        %927 = vrot.lane.b32.xlu0 %v810, 120
        %v928 = vpop.permute.xlu0 %927
        %929 = vrot.lane.b32.xlu0 %v811, 120
        %v930 = vpop.permute.xlu0 %929
        %931 = vrot.lane.b32.xlu0 %v812, 120
        %v932 = vpop.permute.xlu0 %931
        %941 = vmatpush.bf16.msra.mxu0 %v932
        %942 = vmatpush.bf16.msra.mxu0 %v930
        %943 = vmatpush.bf16.msra.mxu0 %v928
        %944 = vmatpush.bf16.msra.mxu0 %v926
        %945 = vmatpush.bf16.msra.mxu0 %v924
        %946 = vmatpush.bf16.msra.mxu0 %v922
        %947 = vmatpush.bf16.msra.mxu0 %v920
        %948 = vmatpush.bf16.msra.mxu0 %v918
        %949 = vmatmul.bf16.gmra.mxu0 %v916
        %v950 = vpop.f32.mrf.mxu0
        %v951 = vadd.f32 0.0, %v950
        %v952 = vpop.f32.mrf.mxu0
        %v953 = vadd.f32 0.0, %v952
        %954 = vdwg.mxu0
        %v955 = vrcp.pop %v913
        %v956 = vrcp.pop %v915
        %v957 = vmul.f32 %v951, %v955
        %v958 = vmul.f32 %v953, %v956
        %961 = vrot.lane.b32.xlu0 %v957, 8
        %v962 = vpop.permute.xlu0 %961
        %963 = vrot.lane.b32.xlu0 %v958, 8
        %v964 = vpop.permute.xlu0 %963
        %vm967 = vcmask 130112
        %968 = vst.msk [vmem:[#allocation4] sm:$0xff] %vm967, %v962
        %969 = vst.msk [vmem:[#allocation4 + $0x8] sm:$0xff] %vm967, %v964
        %970 = vrot.lane.b32.xlu0 %v671, 112
        %v971 = vpop.permute.xlu0 %970
        %972 = vrot.lane.b32.xlu0 %v704, 112
        %v973 = vpop.permute.xlu0 %972
        %974 = vrot.lane.b32.xlu0 %v705, 112
        %v975 = vpop.permute.xlu0 %974
        %976 = vrot.lane.b32.xlu0 %v706, 112
        %v977 = vpop.permute.xlu0 %976
        %978 = vrot.lane.b32.xlu0 %v707, 112
        %v979 = vpop.permute.xlu0 %978
        %980 = vrot.lane.b32.xlu0 %v708, 112
        %v981 = vpop.permute.xlu0 %980
        %982 = vrot.lane.b32.xlu0 %v709, 112
        %v983 = vpop.permute.xlu0 %982
        %984 = vrot.lane.b32.xlu0 %v710, 112
        %v985 = vpop.permute.xlu0 %984
        %986 = vrot.lane.b32.xlu0 %v711, 112
        %v987 = vpop.permute.xlu0 %986
        %v989 = vsel %vm712, %v971, 0
        %v992 = vsel %vm712, %v973, 0
        %v995 = vsel %vm712, %v975, 0
        %v998 = vsel %vm712, %v977, 0
        %v1001 = vsel %vm712, %v979, 0
        %v1004 = vsel %vm712, %v981, 0
        %v1007 = vsel %vm712, %v983, 0
        %v1010 = vsel %vm712, %v985, 0
        %v1013 = vsel %vm712, %v987, 0
        %1015 = vmatpush.bf16.xpose.msra.mxu0 %v1013
        %1016 = vmatpush.bf16.xpose.msra.mxu0 %v1010
        %1017 = vmatpush.bf16.xpose.msra.mxu0 %v1007
        %1018 = vmatpush.bf16.xpose.msra.mxu0 %v1004
        %1019 = vmatpush.bf16.xpose.msra.mxu0 %v1001
        %1020 = vmatpush.bf16.xpose.msra.mxu0 %v998
        %1021 = vmatpush.bf16.xpose.msra.mxu0 %v995
        %1022 = vmatpush.bf16.xpose.msra.mxu0 %v992
        %1023 = vmatmul.bf16.gmra.mxu0 %v989
        %v1024 = vpop.f32.mrf.mxu0
        %v1025 = vadd.f32 0.0, %v1024
        %v1026 = vpop.f32.mrf.mxu0
        %v1027 = vadd.f32 0.0, %v1026
        %1028 = vdwg.mxu0
        %v1029 = vsel %vm755, %v1025, -1e+30
        %v1030 = vsel %vm755, %v1027, -1e+30
        %1031 = vmax.xlane.f32.xlu0 %v1029
        %v1032 = vpop.xlane.xlu0 %1031
        %1033 = vmax.xlane.f32.xlu0 %v1030
        %v1034 = vpop.xlane.xlu0 %1033
        %v1035 = vsub.f32 %v1029, %v1032
        %v1036 = vsub.f32 %v1030, %v1034
        %v1037 = vmul.f32 %v1035, 1.442695
        %v1038 = vpow.pop %v1037
        %v1039 = vmul.f32 %v1036, 1.442695
        %v1040 = vpow.pop %v1039
        %1041 = vadd.xlane.f32.xlu0 %v1038
        %v1042 = vpop.xlane.xlu0 %1041
        %1043 = vadd.xlane.f32.xlu0 %v1040
        %v1044 = vpop.xlane.xlu0 %1043
        %v1045 = vpack.c.bf16 %v1040, %v1038
        %1046 = vrot.lane.b32.xlu0 %v805, 112
        %v1047 = vpop.permute.xlu0 %1046
        %1048 = vrot.lane.b32.xlu0 %v806, 112
        %v1049 = vpop.permute.xlu0 %1048
        %1050 = vrot.lane.b32.xlu0 %v807, 112
        %v1051 = vpop.permute.xlu0 %1050
        %1052 = vrot.lane.b32.xlu0 %v808, 112
        %v1053 = vpop.permute.xlu0 %1052
        %1054 = vrot.lane.b32.xlu0 %v809, 112
        %v1055 = vpop.permute.xlu0 %1054
        %1056 = vrot.lane.b32.xlu0 %v810, 112
        %v1057 = vpop.permute.xlu0 %1056
        %1058 = vrot.lane.b32.xlu0 %v811, 112
        %v1059 = vpop.permute.xlu0 %1058
        %1060 = vrot.lane.b32.xlu0 %v812, 112
        %v1061 = vpop.permute.xlu0 %1060
        %1070 = vmatpush.bf16.msra.mxu0 %v1061
        %1071 = vmatpush.bf16.msra.mxu0 %v1059
        %1072 = vmatpush.bf16.msra.mxu0 %v1057
        %1073 = vmatpush.bf16.msra.mxu0 %v1055
        %1074 = vmatpush.bf16.msra.mxu0 %v1053
        %1075 = vmatpush.bf16.msra.mxu0 %v1051
        %1076 = vmatpush.bf16.msra.mxu0 %v1049
        %1077 = vmatpush.bf16.msra.mxu0 %v1047
        %1078 = vmatmul.bf16.gmra.mxu0 %v1045
        %v1079 = vpop.f32.mrf.mxu0
        %v1080 = vadd.f32 0.0, %v1079
        %v1081 = vpop.f32.mrf.mxu0
        %v1082 = vadd.f32 0.0, %v1081
        %1083 = vdwg.mxu0
        %v1084 = vrcp.pop %v1042
        %v1085 = vrcp.pop %v1044
        %v1086 = vmul.f32 %v1080, %v1084
        %v1087 = vmul.f32 %v1082, %v1085
        %1090 = vrot.lane.b32.xlu0 %v1086, 16
        %v1091 = vpop.permute.xlu0 %1090
        %1092 = vrot.lane.b32.xlu0 %v1087, 16
        %v1093 = vpop.permute.xlu0 %1092
        %vm1096 = vcmask 195712
        %1097 = vst.msk [vmem:[#allocation4] sm:$0xff] %vm1096, %v1091
        %1098 = vst.msk [vmem:[#allocation4 + $0x8] sm:$0xff] %vm1096, %v1093
        %1099 = vrot.lane.b32.xlu0 %v671, 104
        %v1100 = vpop.permute.xlu0 %1099
        %1101 = vrot.lane.b32.xlu0 %v704, 104
        %v1102 = vpop.permute.xlu0 %1101
        %1103 = vrot.lane.b32.xlu0 %v705, 104
        %v1104 = vpop.permute.xlu0 %1103
        %1105 = vrot.lane.b32.xlu0 %v706, 104
        %v1106 = vpop.permute.xlu0 %1105
        %1107 = vrot.lane.b32.xlu0 %v707, 104
        %v1108 = vpop.permute.xlu0 %1107
        %1109 = vrot.lane.b32.xlu0 %v708, 104
        %v1110 = vpop.permute.xlu0 %1109
        %1111 = vrot.lane.b32.xlu0 %v709, 104
        %v1112 = vpop.permute.xlu0 %1111
        %1113 = vrot.lane.b32.xlu0 %v710, 104
        %v1114 = vpop.permute.xlu0 %1113
        %1115 = vrot.lane.b32.xlu0 %v711, 104
        %v1116 = vpop.permute.xlu0 %1115
        %v1118 = vsel %vm712, %v1100, 0
        %v1121 = vsel %vm712, %v1102, 0
        %v1124 = vsel %vm712, %v1104, 0
        %v1127 = vsel %vm712, %v1106, 0
        %v1130 = vsel %vm712, %v1108, 0
        %v1133 = vsel %vm712, %v1110, 0
        %v1136 = vsel %vm712, %v1112, 0
        %v1139 = vsel %vm712, %v1114, 0
        %v1142 = vsel %vm712, %v1116, 0
        %1144 = vmatpush.bf16.xpose.msra.mxu0 %v1142
        %1145 = vmatpush.bf16.xpose.msra.mxu0 %v1139
        %1146 = vmatpush.bf16.xpose.msra.mxu0 %v1136
        %1147 = vmatpush.bf16.xpose.msra.mxu0 %v1133
        %1148 = vmatpush.bf16.xpose.msra.mxu0 %v1130
        %1149 = vmatpush.bf16.xpose.msra.mxu0 %v1127
        %1150 = vmatpush.bf16.xpose.msra.mxu0 %v1124
        %1151 = vmatpush.bf16.xpose.msra.mxu0 %v1121
        %1152 = vmatmul.bf16.gmra.mxu0 %v1118
        %v1153 = vpop.f32.mrf.mxu0
        %v1154 = vadd.f32 0.0, %v1153
        %v1155 = vpop.f32.mrf.mxu0
        %v1156 = vadd.f32 0.0, %v1155
        %1157 = vdwg.mxu0
        %v1158 = vsel %vm755, %v1154, -1e+30
        %v1159 = vsel %vm755, %v1156, -1e+30
        %1160 = vmax.xlane.f32.xlu0 %v1158
        %v1161 = vpop.xlane.xlu0 %1160
        %1162 = vmax.xlane.f32.xlu0 %v1159
        %v1163 = vpop.xlane.xlu0 %1162
        %v1164 = vsub.f32 %v1158, %v1161
        %v1165 = vsub.f32 %v1159, %v1163
        %v1166 = vmul.f32 %v1164, 1.442695
        %v1167 = vpow.pop %v1166
        %v1168 = vmul.f32 %v1165, 1.442695
        %v1169 = vpow.pop %v1168
        %1170 = vadd.xlane.f32.xlu0 %v1167
        %v1171 = vpop.xlane.xlu0 %1170
        %1172 = vadd.xlane.f32.xlu0 %v1169
        %v1173 = vpop.xlane.xlu0 %1172
        %v1174 = vpack.c.bf16 %v1169, %v1167
        %1175 = vrot.lane.b32.xlu0 %v805, 104
        %v1176 = vpop.permute.xlu0 %1175
        %1177 = vrot.lane.b32.xlu0 %v806, 104
        %v1178 = vpop.permute.xlu0 %1177
        %1179 = vrot.lane.b32.xlu0 %v807, 104
        %v1180 = vpop.permute.xlu0 %1179
        %1181 = vrot.lane.b32.xlu0 %v808, 104
        %v1182 = vpop.permute.xlu0 %1181
        %1183 = vrot.lane.b32.xlu0 %v809, 104
        %v1184 = vpop.permute.xlu0 %1183
        %1185 = vrot.lane.b32.xlu0 %v810, 104
        %v1186 = vpop.permute.xlu0 %1185
        %1187 = vrot.lane.b32.xlu0 %v811, 104
        %v1188 = vpop.permute.xlu0 %1187
        %1189 = vrot.lane.b32.xlu0 %v812, 104
        %v1190 = vpop.permute.xlu0 %1189
        %1199 = vmatpush.bf16.msra.mxu0 %v1190
        %1200 = vmatpush.bf16.msra.mxu0 %v1188
        %1201 = vmatpush.bf16.msra.mxu0 %v1186
        %1202 = vmatpush.bf16.msra.mxu0 %v1184
        %1203 = vmatpush.bf16.msra.mxu0 %v1182
        %1204 = vmatpush.bf16.msra.mxu0 %v1180
        %1205 = vmatpush.bf16.msra.mxu0 %v1178
        %1206 = vmatpush.bf16.msra.mxu0 %v1176
        %1207 = vmatmul.bf16.gmra.mxu0 %v1174
        %v1208 = vpop.f32.mrf.mxu0
        %v1209 = vadd.f32 0.0, %v1208
        %v1210 = vpop.f32.mrf.mxu0
        %v1211 = vadd.f32 0.0, %v1210
        %1212 = vdwg.mxu0
        %v1213 = vrcp.pop %v1171
        %v1214 = vrcp.pop %v1173
        %v1215 = vmul.f32 %v1209, %v1213
        %v1216 = vmul.f32 %v1211, %v1214
        %1219 = vrot.lane.b32.xlu0 %v1215, 24
        %v1220 = vpop.permute.xlu0 %1219
        %1221 = vrot.lane.b32.xlu0 %v1216, 24
        %v1222 = vpop.permute.xlu0 %1221
        %vm1225 = vcmask 261312
        %1226 = vst.msk [vmem:[#allocation4] sm:$0xff] %vm1225, %v1220
        %1227 = vst.msk [vmem:[#allocation4 + $0x8] sm:$0xff] %vm1225, %v1222
        %v1228 = vld [vmem:[#allocation4] sm:$0xff]
        %v1229 = vld [vmem:[#allocation4 + $0x8] sm:$0xff]
        %v1230 = vpack.c.bf16 %v1229, %v1228
        %v1231 = vld [vmem:[%s5] sm:$0xf]
        %v1232 = vld [vmem:[%s5 + $0x4] sm:$0xf]
        %v1233 = vld [vmem:[%s5 + $0x8] sm:$0xf]
        %v1234 = vld [vmem:[%s5 + $0xc] sm:$0xf]
        %v1235 = vld [vmem:[%s6] sm:$0x1]
        %v1237 = vperm.slane %v1235, 0
        %v1243 = vunpack.c.l.b16 %v1231
        %v1244 = vunpack.c.l.b16 %v1232
        %v1245 = vunpack.c.l.b16 %v1233
        %v1246 = vunpack.c.l.b16 %v1234
        %v1247 = vpack.c.b16 %v1244, %v1243
        %v1248 = vpack.c.b16 %v1246, %v1245
        %v1252 = vsel %vm612, %v1230, 0
        %1254 = vmatpush.bf16.msra.mxu0 0
        %1255 = vmatpush.bf16.msra.mxu0 0
        %1256 = vmatpush.bf16.msra.mxu0 0
        %1257 = vmatpush.bf16.msra.mxu0 0
        %1258 = vmatpush.bf16.msra.mxu0 0
        %1259 = vmatpush.bf16.msra.mxu0 0
        %1260 = vmatpush.bf16.msra.mxu0 %v1248
        %1261 = vmatpush.bf16.msra.mxu0 %v1247
        %1262 = vmatmul.bf16.gmra.mxu0 %v1252
        %v1263 = vpop.f32.mrf.mxu0
        %v1264 = vadd.f32 %v1237, %v1263
        %v1265 = vpop.f32.mrf.mxu0
        %v1266 = vadd.f32 %v1237, %v1265
        %1267 = vdwg.mxu0
        %1268 = vst.msk [vmem:[%s311] sm:$0xff] %vm612, %v1264
        %1269 = vst.msk [vmem:[%s311 + $0x8] sm:$0xff] %vm612, %v1266
        %s1270 = sand.u32 %s202, 1
        %s1271 = scalar_lea.sflag [#allocation6], %s1270
        %s1272 = sand.u32 %s202, 1
        %s1273 = smul.addr %s1272, 16
        %s1274 = scalar_lea.vmem [#allocation5], %s1273
        // Predicated region
        $region49: #{tpu_custom_call.1} parent=47 // pred_check
          %p1275 = pneg %p212
        $region50: #{tpu_custom_call.1} parent=47 // pred_check_branch
          %1277 = sbr.rel (%p1275) target = $region52
        $region51: #{tpu_custom_call.1} parent=47 // pred_region
          %s1278 = smul.u32 2, %s26
          %1280 = vsyncadd %s1271, 0
          %s1281 = smul.addr %s25, 2
          %s1282 = sadd.s32 %s1278, %s1281
          %s1283 = smul.addr %s1282, 8
          %s1284 = scalar_lea.hbm %s7, %s1283
          %s1285 = sshll.u32 %s1274, 4
          %s1286 = int_to_ptr.vmem [resolvable:$true] %s1285
          %s1287 = sshll.u32 %s1284, 4
          %s1288 = int_to_ptr.hbm [resolvable:$true] %s1287
          %1293 = dma.vmem_to_hbm [thread:$0]  %s1286, 256, %s1288, %s1271, 128, 128, 8
        $region52: #{tpu_custom_call.1} parent=47 // pred_fallthru
          _
      $region48: #{tpu_custom_call.1} parent=5 // pred_fallthru
        _
      %p1294 = scmp.le.s32.totalorder 2, %s16
      // Predicated region
      $region53: #{tpu_custom_call.1} parent=5 // pred_check
        %p1295 = pneg %p1294
      $region54: #{tpu_custom_call.1} parent=5 // pred_check_branch
        %1297 = sbr.rel (%p1295) target = $region56
      $region55: #{tpu_custom_call.1} parent=5 // pred_region
        %s1298 = ssub.s32 %s16, 2
        // Predicated region
        $region57: #{tpu_custom_call.1} parent=55 // pred_check
          %p1299 = pneg %p218
        $region58: #{tpu_custom_call.1} parent=55 // pred_check_branch
          %1301 = sbr.rel (%p1299) target = $region60
        $region59: #{tpu_custom_call.1} parent=55 // pred_region
          %s1302 = sand.u32 %s203, 1
          %s1303 = scalar_lea.sflag [#allocation6], %s1302
          %s1304 = sand.u32 %s203, 1
          %s1305 = smul.addr %s1304, 16
          %s1306 = scalar_lea.vmem [#allocation5], %s1305
          %1308 = dma.done %s1303, 256
        $region60: #{tpu_custom_call.1} parent=55 // pred_fallthru
          _
      $region56: #{tpu_custom_call.1} parent=5 // pred_fallthru
        _
    $region6: #{tpu_custom_call.1} parent=1 // loop_footer
      %s20 = sadd.s32 1, %s16
    $region7: #{tpu_custom_call.1} parent=1 // loop_footer_branch
      %15 = sbr.rel target = $region3
    $region8: #{tpu_custom_call.1} parent=1 // loop_exit
      _
    %1309 = vsyncpa [#allocation6], 1
    %s1310 = scalar_lea.sflag [#allocation6], 1
    %1311 = vsyncpa %s1310, 1

</llo_original>
